<compile_context>
chip_gen: v7x
topology: tpu7x:2x2x1
jax: 0.10.0
libtpu: 0.0.40
codegen_flags: <defaults>
</compile_context>

<pallas_src>
import functools

import jax
import jax.numpy as jnp
from jax import lax
from jax.experimental import pallas as pl
from jax.experimental.pallas import tpu as pltpu


def _embed_gather_kernel(ids_ref, table_ref, out_ref, onehot_ref, *,
                         vocab, pack, precision):
    """Gather one token tile with a single fused one-hot MXU matmul.

    ids_ref    : (TPACK, pack) int32      -- `pack` consecutive tokens per output row
    table_ref  : (pack*V, pack*D)         -- block-diagonal table, VMEM resident
    out_ref    : (TPACK, pack*D)          -- lane-dense output tile (pack*D == 128 typ.)
    onehot_ref : (TPACK, pack*V) scratch  -- fused one-hot LHS, rebuilt per tile
    """
    tpack = ids_ref.shape[0]
    ids = ids_ref[...]
    # One compare per (token, vocab) element.  Segment j of the fused one-hot
    # row selects token slot j against the j-th diagonal block of the table.
    col = lax.broadcasted_iota(jnp.int32, (tpack, vocab), 1)
    for j in range(pack):  # pack <= 4, fully unrolled
        onehot_ref[:, j * vocab:(j + 1) * vocab] = (
            (col == ids[:, j:j + 1]).astype(onehot_ref.dtype))
    # Single MXU matmul per tile: (TPACK, pack*V) @ (pack*V, pack*D).
    rows = jnp.dot(onehot_ref[...], table_ref[...],
                   preferred_element_type=jnp.float32, precision=precision)
    # Single unmasked, lane-dense store (last dim a multiple of 128 typically).
    out_ref[...] = rows.astype(out_ref.dtype)


def _vmem_budget_bytes():
    """Generation-aware VMEM budget (75% of per-core capacity)."""
    cap = 64 * 1024 * 1024  # conservative default (v7x per-TC VMEM)
    try:
        info = pltpu.get_tpu_info()
        c = getattr(info, "vmem_capacity_bytes", None)
        if c:
            cap = int(c)
    except Exception:
        pass
    return (cap * 3) // 4   # ~96 MiB on v5e/v6e, ~48 MiB on v7x


def embedding_layer_forward(seq, embed_matrix, *, tok_tile=1024,
                            compute_dtype=jnp.bfloat16, use_pallas=None,
                            max_fast_vocab=8192):
    """Forward pass of EmbeddingLayer (inference / eval mode)."""
    B, L = seq.shape
    V, D = embed_matrix.shape
    n_tok = B * L
    out_dtype = embed_matrix.dtype
    itemsize_c = jnp.dtype(compute_dtype).itemsize
    itemsize_o = jnp.dtype(out_dtype).itemsize

    # Clamp out-of-range ids so a bad token can never index outside the table.
    flat_ids = jnp.clip(seq.reshape(-1).astype(jnp.int32), 0, V - 1)

    # Lane-dense packing: `pack` consecutive tokens per output row so the output
    # tile's last dim is a multiple of 128.
    if D % 128 == 0:
        pack = 1
    elif 128 % D == 0:
        pack = 128 // D
    else:
        pack = 1  # TODO(synk): lane-pad D for embed dims that do not divide 128.
    lane_dense = (D % 128 == 0) or (128 % D == 0)

    # Token tile (tokens per grid step); keep row counts multiples of 8 sublanes.
    unit = 8 * pack
    tt = tok_tile
    if n_tok < tt:
        tt = ((n_tok + unit - 1) // unit) * unit
    else:
        tt = max(unit, (tt // unit) * unit)
    tpack = tt // pack

    # ---- VMEM feasibility (table x2 for pipeline buffering, one-hot scratch,
    # ---- iota/compare temporaries, double-buffered ids & output tiles). ----
    vmem_budget = _vmem_budget_bytes()
    table_vmem = 2 * (pack * V) * (pack * D) * itemsize_c   # block-diag, x2 buffering
    onehot_vmem = tpack * pack * V * itemsize_c             # scratch (single copy)
    iota_vmem = 2 * tpack * V * 4                           # iota + compare temps
    out_vmem = 2 * tpack * pack * D * itemsize_o + tpack * pack * D * 4
    ids_vmem = 2 * tpack * pack * 4
    est = table_vmem + onehot_vmem + iota_vmem + out_vmem + ids_vmem
    est = (est * 5) // 4                                    # 25% headroom

    if use_pallas is None:
        # Tiny problems: pallas_call launch overhead dominates; XLA gather wins.
        use_pallas = n_tok * D * itemsize_o >= 256 * 1024

    # Vocab cap: the one-hot gather costs V*D MACs/token + O(V) VPU compares
    # per token; large vocabularies lose to XLA's gather (use a lower cap on
    # v5e, whose MXU peak is ~4-5x lower than v6e/v7x).
    fast_ok = (use_pallas and lane_dense and V <= max_fast_vocab
               and est <= vmem_budget)

    if not fast_ok:
        # TODO(synk): vocab-partitioned / batched-DMA gather kernel for tables
        # too large to keep VMEM-resident.
        return jnp.take(embed_matrix, flat_ids, axis=0).reshape(B, L, D)

    n_pad = pl.cdiv(n_tok, tt) * tt
    ids_pad = jnp.pad(flat_ids, (0, n_pad - n_tok))          # pad with id 0
    ids_grouped = ids_pad.reshape(n_pad // pack, pack)
    n_tiles = n_pad // tt

    # Table in compute dtype; block-diagonal so one matmul covers all pack slots.
    table_c = embed_matrix.astype(compute_dtype)
    if pack == 1:
        table_in = table_c                                   # (V, D)
    else:
        table_in = jnp.kron(jnp.eye(pack, dtype=compute_dtype), table_c)
    bd_shape = table_in.shape                                # (pack*V, pack*D)

    # bf16 operands: full-rate MXU; f32 operands: force exact multi-pass gather.
    precision = (lax.Precision.HIGHEST
                 if jnp.dtype(compute_dtype) == jnp.dtype(jnp.float32) else None)

    kernel = functools.partial(_embed_gather_kernel, vocab=V, pack=pack,
                               precision=precision)

    out_packed = pl.pallas_call(
        kernel,
        out_shape=jax.ShapeDtypeStruct((n_pad // pack, pack * D), out_dtype),
        grid_spec=pltpu.PrefetchScalarGridSpec(
            num_scalar_prefetch=0,
            grid=(n_tiles,),
            in_specs=[
                # Token-id tile for this grid step (tiny; 4 KiB-ish per tile).
                pl.BlockSpec((tpack, pack), lambda i: (i, 0)),
                # Full (block-diagonal) table, VMEM resident (constant index).
                # Residency check above already counts 2x for pipeline buffers.
                pl.BlockSpec(bd_shape, lambda i: (0, 0)),
            ],
            out_specs=pl.BlockSpec((tpack, pack * D), lambda i: (i, 0)),
            scratch_shapes=[pltpu.VMEM((tpack, pack * V), compute_dtype)],
        ),
        compiler_params=pltpu.CompilerParams(
            dimension_semantics=("parallel",),   # tokens independent; both v7x TCs
            vmem_limit_bytes=vmem_budget,
        ),
    )(ids_grouped, table_in)

    # (n_pad//pack, pack*D) -> (n_pad, D) is a bitcast-compatible (free) reshape.
    emb = out_packed.reshape(n_pad, D)[:n_tok].reshape(B, L, D)

    # SpatialDropout(0.35) (channel-wise nn.Dropout2d) is the identity in eval mode.
    # TODO(synk): training-mode SpatialDropout (per-channel Bernoulli mask via pltpu.prng_*).
    return emb


if __name__ == "__main__":
    # Small, deterministic synthetic setup consistent with the module.
    VOCAB, EMBED_DIM = 512, 32
    B, L = 2, 128

    key = jax.random.PRNGKey(0)
    k_emb, k_seq = jax.random.split(key)

    embed_matrix = jax.random.normal(k_emb, (VOCAB, EMBED_DIM), dtype=jnp.float32)
    seq = jax.random.randint(k_seq, (B, L), minval=0, maxval=VOCAB, dtype=jnp.int32)

    out = embedding_layer_forward(seq, embed_matrix, use_pallas=True)
    out = jax.block_until_ready(out)

    assert out.shape == (B, L, EMBED_DIM), out.shape
    assert out.dtype == embed_matrix.dtype, out.dtype

    # The default fast path gathers the bf16-rounded table (exact w.r.t. that),
    # and stays within bf16 rounding (<~0.4% rel.) of the true f32 embeddings.
    ref_bf16 = jnp.take(embed_matrix.astype(jnp.bfloat16).astype(jnp.float32),
                        seq, axis=0)
    ref_f32 = jnp.take(embed_matrix, seq, axis=0)
    assert jnp.allclose(out, ref_bf16, rtol=0.0, atol=1e-6), \
        "mismatch vs bf16-table reference gather"
    assert jnp.allclose(out, ref_f32, rtol=2e-2, atol=2e-2), \
        "mismatch vs f32 reference embedding lookup"

    print("KERNEL_OK")
</pallas_src>

<mosaic_0001>
module attributes {stable_mosaic.version = 11 : i64} {
  func.func @_embed_gather_kernel(%arg0: i32, %arg1: memref<64x4xi32, #tpu.memory_space<vmem>>, %arg2: memref<2048x128xbf16, #tpu.memory_space<vmem>>, %arg3: memref<64x128xf32, #tpu.memory_space<vmem>>, %arg4: memref<64x2048xbf16, #tpu.memory_space<vmem>>) attributes {dimension_semantics = [#tpu.dimension_semantics<parallel>], iteration_bounds = array<i64: 1>, scalar_prefetch = 0 : i64, scratch_operands = 1 : i64, tpu.core_type = #tpu.core_type<tc>, window_params = [{transform_indices = @transform_0, window_bounds = array<i64: 64, 4>}, {pipeline_mode = #tpu.pipeline_mode<synchronous>, transform_indices = @transform_1, window_bounds = array<i64: 2048, 128>}, {transform_indices = @transform_2, window_bounds = array<i64: 64, 128>}]} {
    %c0 = arith.constant 0 : index
    %c0_0 = arith.constant 0 : index
    %0 = vector.load %arg1[%c0, %c0_0] : memref<64x4xi32, #tpu.memory_space<vmem>>, vector<64x4xi32>
    %1 = tpu.iota {dimensions = array<i32: 1>} : vector<64x512xi32>
    %2 = vector.extract_strided_slice %0 {offsets = [0, 0], sizes = [64, 1], strides = [1, 1]} : vector<64x4xi32> to vector<64x1xi32>
    %3 = vector.broadcast %2 : vector<64x1xi32> to vector<64x512xi32>
    %4 = arith.cmpi eq, %1, %3 : vector<64x512xi32>
    %5 = arith.extui %4 : vector<64x512xi1> to vector<64x512xi32>
    %6 = arith.sitofp %5 : vector<64x512xi32> to vector<64x512xf32>
    %7 = arith.truncf %6 : vector<64x512xf32> to vector<64x512xbf16>
    %c0_1 = arith.constant 0 : index
    %c0_2 = arith.constant 0 : index
    %8 = vector.load %arg4[%c0_1, %c0_2] : memref<64x2048xbf16, #tpu.memory_space<vmem>>, vector<64x512xbf16>
    tpu.vector_store %arg4[%c0_1, %c0_2], %7 {strides = array<i32>} : memref<64x2048xbf16, #tpu.memory_space<vmem>>, vector<64x512xbf16>,
    %9 = vector.extract_strided_slice %0 {offsets = [0, 1], sizes = [64, 1], strides = [1, 1]} : vector<64x4xi32> to vector<64x1xi32>
    %10 = vector.broadcast %9 : vector<64x1xi32> to vector<64x512xi32>
    %11 = arith.cmpi eq, %1, %10 : vector<64x512xi32>
    %12 = arith.extui %11 : vector<64x512xi1> to vector<64x512xi32>
    %13 = arith.sitofp %12 : vector<64x512xi32> to vector<64x512xf32>
    %14 = arith.truncf %13 : vector<64x512xf32> to vector<64x512xbf16>
    %c0_3 = arith.constant 0 : index
    %c512 = arith.constant 512 : index
    %15 = vector.load %arg4[%c0_3, %c512] : memref<64x2048xbf16, #tpu.memory_space<vmem>>, vector<64x512xbf16>
    tpu.vector_store %arg4[%c0_3, %c512], %14 {strides = array<i32>} : memref<64x2048xbf16, #tpu.memory_space<vmem>>, vector<64x512xbf16>,
    %16 = vector.extract_strided_slice %0 {offsets = [0, 2], sizes = [64, 1], strides = [1, 1]} : vector<64x4xi32> to vector<64x1xi32>
    %17 = vector.broadcast %16 : vector<64x1xi32> to vector<64x512xi32>
    %18 = arith.cmpi eq, %1, %17 : vector<64x512xi32>
    %19 = arith.extui %18 : vector<64x512xi1> to vector<64x512xi32>
    %20 = arith.sitofp %19 : vector<64x512xi32> to vector<64x512xf32>
    %21 = arith.truncf %20 : vector<64x512xf32> to vector<64x512xbf16>
    %c0_4 = arith.constant 0 : index
    %c1024 = arith.constant 1024 : index
    %22 = vector.load %arg4[%c0_4, %c1024] : memref<64x2048xbf16, #tpu.memory_space<vmem>>, vector<64x512xbf16>
    tpu.vector_store %arg4[%c0_4, %c1024], %21 {strides = array<i32>} : memref<64x2048xbf16, #tpu.memory_space<vmem>>, vector<64x512xbf16>,
    %23 = vector.extract_strided_slice %0 {offsets = [0, 3], sizes = [64, 1], strides = [1, 1]} : vector<64x4xi32> to vector<64x1xi32>
    %24 = vector.broadcast %23 : vector<64x1xi32> to vector<64x512xi32>
    %25 = arith.cmpi eq, %1, %24 : vector<64x512xi32>
    %26 = arith.extui %25 : vector<64x512xi1> to vector<64x512xi32>
    %27 = arith.sitofp %26 : vector<64x512xi32> to vector<64x512xf32>
    %28 = arith.truncf %27 : vector<64x512xf32> to vector<64x512xbf16>
    %c0_5 = arith.constant 0 : index
    %c1536 = arith.constant 1536 : index
    %29 = vector.load %arg4[%c0_5, %c1536] : memref<64x2048xbf16, #tpu.memory_space<vmem>>, vector<64x512xbf16>
    tpu.vector_store %arg4[%c0_5, %c1536], %28 {strides = array<i32>} : memref<64x2048xbf16, #tpu.memory_space<vmem>>, vector<64x512xbf16>,
    %c0_6 = arith.constant 0 : index
    %c0_7 = arith.constant 0 : index
    %30 = vector.load %arg4[%c0_6, %c0_7] : memref<64x2048xbf16, #tpu.memory_space<vmem>>, vector<64x2048xbf16>
    %c0_8 = arith.constant 0 : index
    %c0_9 = arith.constant 0 : index
    %31 = vector.load %arg2[%c0_8, %c0_9] : memref<2048x128xbf16, #tpu.memory_space<vmem>>, vector<2048x128xbf16>
    %cst = arith.constant dense<0.000000e+00> : vector<64x128xf32>
    %32 = tpu.matmul %30, %31, %cst {dimension_numbers = #tpu.dot_dimension_numbers<[1], [0], [0], [1], [0, 0, 1, 1], [], []>} : vector<64x2048xbf16>, vector<2048x128xbf16>, vector<64x128xf32> -> vector<64x128xf32>
    %c0_10 = arith.constant 0 : index
    %c0_11 = arith.constant 0 : index
    %33 = vector.load %arg3[%c0_10, %c0_11] : memref<64x128xf32, #tpu.memory_space<vmem>>, vector<64x128xf32>
    tpu.vector_store %arg3[%c0_10, %c0_11], %32 {strides = array<i32>} : memref<64x128xf32, #tpu.memory_space<vmem>>, vector<64x128xf32>,
    return
  }
  func.func @transform_0(%arg0: i32) -> (i32, i32) {
    %c0_i32 = arith.constant 0 : i32
    %c0_i32_0 = arith.constant 0 : i32
    return %arg0, %c0_i32 : i32, i32
  }
  func.func @transform_1(%arg0: i32) -> (i32, i32) {
    %c0_i32 = arith.constant 0 : i32
    %c0_i32_0 = arith.constant 0 : i32
    %c0_i32_1 = arith.constant 0 : i32
    return %c0_i32, %c0_i32_0 : i32, i32
  }
  func.func @transform_2(%arg0: i32) -> (i32, i32) {
    %c0_i32 = arith.constant 0 : i32
    %c0_i32_0 = arith.constant 0 : i32
    return %arg0, %c0_i32 : i32, i32
  }
}

</mosaic_0001>

<llo_original>
// kernel: tpu_custom_call.1
$region0: #{tpu_custom_call.1}
  #allocation0 [shape = 'u32[]', space=smem, size = 0x4, offset = 0x4, fixed_abs, tag = 'smem constant byte address 0x4 - core index']
  #allocation1 [shape = 'u32[144,128]{1,0:T(1,128)}', space=vmem, size = 0x12000, scoped, tag = 'internal scratch']
  #allocation2 [shape = 'bf16[64,2048]{1,0:T(16,128)(2,1)}', space=vmem, size = 0x40000, scoped, tag = 'scratch operand']
  %s0 = inlined_call_operand.vmem [shape: s32[64,4], index: 0, kind: input, shape index: {}]
  %s1 = inlined_call_operand.hbm [shape: bf16[2048,128], index: 1, kind: input, shape index: {}]
  %s2 = inlined_call_operand.hbm [shape: f32[64,128], index: 2, kind: output, shape index: {}]
  %s3 = sld [smem:[#allocation0]]
  $region22: #{tpu_custom_call.1} parent=0
    _
  %s5 = ssub.s32 1, %s3
  %s6 = scalar_select 0, %s5, %s3
  $region1: #{tpu_custom_call.1} parent=0
    #allocation3 [shape = 'u8[524288]{0}', space=vmem, size = 0x80000, scoped, tag = 'input window, operand 1, single buffered']
    #allocation4 [shape = 's32[1]{0}', space=sflag, size = 0x4, scoped, tag = 'scoped memory for tpu_custom_call.1']
    #allocation5 [shape = 's32[1]{0}', space=sflag, size = 0x4, scoped, tag = 'scoped memory for tpu_custom_call.1']
    #allocation6 [shape = 'u8[32768]{0}', space=vmem, size = 0x8000, scoped, tag = 'output window, operand 0, single buffered']
    %7 = vsyncpa [#allocation4], 0
    %8 = vsyncpa [#allocation5], 0
    // Predicated region
    $region2: #{tpu_custom_call.1} parent=1 // pred_check
      _
    $region3: #{tpu_custom_call.1} parent=1 // pred_check_branch
      %10 = sbr.rel (0) target = $region5
    $region4: #{tpu_custom_call.1} parent=1 // pred_region
      _
    $region5: #{tpu_custom_call.1} parent=1 // pred_fallthru
      _
    // Predicated region
    $region6: #{tpu_custom_call.1} parent=1 // pred_check
      _
    $region7: #{tpu_custom_call.1} parent=1 // pred_check_branch
      %12 = sbr.rel (0) target = $region9
    $region8: #{tpu_custom_call.1} parent=1 // pred_region
      %s14 = ssub.s32 16384, 16384
      %15 = vsyncadd [#allocation4], %s14
      %s16 = sshll.u32 [#allocation3], 4
      %s17 = int_to_ptr.vmem [resolvable:$true] %s16
      %22 = dma.hbm_to_vmem [thread:$0]  %s1, 16384, %s17, [#allocation4], 64, 64, 4
    $region9: #{tpu_custom_call.1} parent=1 // pred_fallthru
      _
    // Predicated region
    $region10: #{tpu_custom_call.1} parent=1 // pred_check
      _
    $region11: #{tpu_custom_call.1} parent=1 // pred_check_branch
      %24 = sbr.rel (0) target = $region13
    $region12: #{tpu_custom_call.1} parent=1 // pred_region
      %25 = dma.done [#allocation4], 16384
    $region13: #{tpu_custom_call.1} parent=1 // pred_fallthru
      _
    %v27 = vld [vmem:[%s0] sm:$0xff]
    %v28 = vld [vmem:[%s0 + $0x8] sm:$0xff]
    %v29 = vld [vmem:[%s0 + $0x10] sm:$0xff]
    %v30 = vld [vmem:[%s0 + $0x18] sm:$0xff]
    %v31 = vld [vmem:[%s0 + $0x20] sm:$0xff]
    %v32 = vld [vmem:[%s0 + $0x28] sm:$0xff]
    %v33 = vld [vmem:[%s0 + $0x30] sm:$0xff]
    %v34 = vld [vmem:[%s0 + $0x38] sm:$0xff]
    %v35 = vlaneseq
    %v36 = vand.u32 %v35, 127
    %v37 = vadd.s32 %v36, 128
    %v38 = vadd.s32 %v36, 256
    %v39 = vadd.s32 %v36, 384
    %40 = vset.pattern.permute.xlu0 0
    %41 = vperm.xlu0 %40, %v27
    %v42 = vpop.permute.xlu0 %41
    %43 = vset.pattern.permute.xlu0 0
    %44 = vperm.xlu0 %43, %v28
    %v45 = vpop.permute.xlu0 %44
    %46 = vset.pattern.permute.xlu0 0
    %47 = vperm.xlu0 %46, %v29
    %v48 = vpop.permute.xlu0 %47
    %49 = vset.pattern.permute.xlu0 0
    %50 = vperm.xlu0 %49, %v30
    %v51 = vpop.permute.xlu0 %50
    %52 = vset.pattern.permute.xlu0 0
    %53 = vperm.xlu0 %52, %v31
    %v54 = vpop.permute.xlu0 %53
    %55 = vset.pattern.permute.xlu0 0
    %56 = vperm.xlu0 %55, %v32
    %v57 = vpop.permute.xlu0 %56
    %58 = vset.pattern.permute.xlu0 0
    %59 = vperm.xlu0 %58, %v33
    %v60 = vpop.permute.xlu0 %59
    %61 = vset.pattern.permute.xlu0 0
    %62 = vperm.xlu0 %61, %v34
    %v63 = vpop.permute.xlu0 %62
    %vm64 = vcmp.eq.s32.totalorder %v36, %v42
    %vm65 = vcmp.eq.s32.totalorder %v37, %v42
    %vm66 = vcmp.eq.s32.totalorder %v38, %v42
    %vm67 = vcmp.eq.s32.totalorder %v39, %v42
    %vm68 = vcmp.eq.s32.totalorder %v36, %v45
    %vm69 = vcmp.eq.s32.totalorder %v37, %v45
    %vm70 = vcmp.eq.s32.totalorder %v38, %v45
    %vm71 = vcmp.eq.s32.totalorder %v39, %v45
    %vm72 = vcmp.eq.s32.totalorder %v36, %v48
    %vm73 = vcmp.eq.s32.totalorder %v37, %v48
    %vm74 = vcmp.eq.s32.totalorder %v38, %v48
    %vm75 = vcmp.eq.s32.totalorder %v39, %v48
    %vm76 = vcmp.eq.s32.totalorder %v36, %v51
    %vm77 = vcmp.eq.s32.totalorder %v37, %v51
    %vm78 = vcmp.eq.s32.totalorder %v38, %v51
    %vm79 = vcmp.eq.s32.totalorder %v39, %v51
    %vm80 = vcmp.eq.s32.totalorder %v36, %v54
    %vm81 = vcmp.eq.s32.totalorder %v37, %v54
    %vm82 = vcmp.eq.s32.totalorder %v38, %v54
    %vm83 = vcmp.eq.s32.totalorder %v39, %v54
    %vm84 = vcmp.eq.s32.totalorder %v36, %v57
    %vm85 = vcmp.eq.s32.totalorder %v37, %v57
    %vm86 = vcmp.eq.s32.totalorder %v38, %v57
    %vm87 = vcmp.eq.s32.totalorder %v39, %v57
    %vm88 = vcmp.eq.s32.totalorder %v36, %v60
    %vm89 = vcmp.eq.s32.totalorder %v37, %v60
    %vm90 = vcmp.eq.s32.totalorder %v38, %v60
    %vm91 = vcmp.eq.s32.totalorder %v39, %v60
    %vm92 = vcmp.eq.s32.totalorder %v36, %v63
    %vm93 = vcmp.eq.s32.totalorder %v37, %v63
    %vm94 = vcmp.eq.s32.totalorder %v38, %v63
    %vm95 = vcmp.eq.s32.totalorder %v39, %v63
    %v96 = vsel %vm64, 1, 0
    %v97 = vsel %vm65, 1, 0
    %v98 = vsel %vm66, 1, 0
    %v99 = vsel %vm67, 1, 0
    %v100 = vsel %vm68, 1, 0
    %v101 = vsel %vm69, 1, 0
    %v102 = vsel %vm70, 1, 0
    %v103 = vsel %vm71, 1, 0
    %v104 = vsel %vm72, 1, 0
    %v105 = vsel %vm73, 1, 0
    %v106 = vsel %vm74, 1, 0
    %v107 = vsel %vm75, 1, 0
    %v108 = vsel %vm76, 1, 0
    %v109 = vsel %vm77, 1, 0
    %v110 = vsel %vm78, 1, 0
    %v111 = vsel %vm79, 1, 0
    %v112 = vsel %vm80, 1, 0
    %v113 = vsel %vm81, 1, 0
    %v114 = vsel %vm82, 1, 0
    %v115 = vsel %vm83, 1, 0
    %v116 = vsel %vm84, 1, 0
    %v117 = vsel %vm85, 1, 0
    %v118 = vsel %vm86, 1, 0
    %v119 = vsel %vm87, 1, 0
    %v120 = vsel %vm88, 1, 0
    %v121 = vsel %vm89, 1, 0
    %v122 = vsel %vm90, 1, 0
    %v123 = vsel %vm91, 1, 0
    %v124 = vsel %vm92, 1, 0
    %v125 = vsel %vm93, 1, 0
    %v126 = vsel %vm94, 1, 0
    %v127 = vsel %vm95, 1, 0
    %v128 = vcvt.s32.f32 %v96
    %v129 = vcvt.s32.f32 %v97
    %v130 = vcvt.s32.f32 %v98
    %v131 = vcvt.s32.f32 %v99
    %v132 = vcvt.s32.f32 %v100
    %v133 = vcvt.s32.f32 %v101
    %v134 = vcvt.s32.f32 %v102
    %v135 = vcvt.s32.f32 %v103
    %v136 = vcvt.s32.f32 %v104
    %v137 = vcvt.s32.f32 %v105
    %v138 = vcvt.s32.f32 %v106
    %v139 = vcvt.s32.f32 %v107
    %v140 = vcvt.s32.f32 %v108
    %v141 = vcvt.s32.f32 %v109
    %v142 = vcvt.s32.f32 %v110
    %v143 = vcvt.s32.f32 %v111
    %v144 = vcvt.s32.f32 %v112
    %v145 = vcvt.s32.f32 %v113
    %v146 = vcvt.s32.f32 %v114
    %v147 = vcvt.s32.f32 %v115
    %v148 = vcvt.s32.f32 %v116
    %v149 = vcvt.s32.f32 %v117
    %v150 = vcvt.s32.f32 %v118
    %v151 = vcvt.s32.f32 %v119
    %v152 = vcvt.s32.f32 %v120
    %v153 = vcvt.s32.f32 %v121
    %v154 = vcvt.s32.f32 %v122
    %v155 = vcvt.s32.f32 %v123
    %v156 = vcvt.s32.f32 %v124
    %v157 = vcvt.s32.f32 %v125
    %v158 = vcvt.s32.f32 %v126
    %v159 = vcvt.s32.f32 %v127
    %v160 = vpack.c.bf16 %v132, %v128
    %v161 = vpack.c.bf16 %v133, %v129
    %v162 = vpack.c.bf16 %v134, %v130
    %v163 = vpack.c.bf16 %v135, %v131
    %v164 = vpack.c.bf16 %v140, %v136
    %v165 = vpack.c.bf16 %v141, %v137
    %v166 = vpack.c.bf16 %v142, %v138
    %v167 = vpack.c.bf16 %v143, %v139
    %v168 = vpack.c.bf16 %v148, %v144
    %v169 = vpack.c.bf16 %v149, %v145
    %v170 = vpack.c.bf16 %v150, %v146
    %v171 = vpack.c.bf16 %v151, %v147
    %v172 = vpack.c.bf16 %v156, %v152
    %v173 = vpack.c.bf16 %v157, %v153
    %v174 = vpack.c.bf16 %v158, %v154
    %v175 = vpack.c.bf16 %v159, %v155
    %176 = vst [vmem:[#allocation2] sm:$0xff] %v160
    %177 = vst [vmem:[#allocation2 + $0x8] sm:$0xff] %v161
    %178 = vst [vmem:[#allocation2 + $0x10] sm:$0xff] %v162
    %179 = vst [vmem:[#allocation2 + $0x18] sm:$0xff] %v163
    %180 = vst [vmem:[#allocation2 + $0x80] sm:$0xff] %v164
    %181 = vst [vmem:[#allocation2 + $0x88] sm:$0xff] %v165
    %182 = vst [vmem:[#allocation2 + $0x90] sm:$0xff] %v166
    %183 = vst [vmem:[#allocation2 + $0x98] sm:$0xff] %v167
    %184 = vst [vmem:[#allocation2 + $0x100] sm:$0xff] %v168
    %185 = vst [vmem:[#allocation2 + $0x108] sm:$0xff] %v169
    %186 = vst [vmem:[#allocation2 + $0x110] sm:$0xff] %v170
    %187 = vst [vmem:[#allocation2 + $0x118] sm:$0xff] %v171
    %188 = vst [vmem:[#allocation2 + $0x180] sm:$0xff] %v172
    %189 = vst [vmem:[#allocation2 + $0x188] sm:$0xff] %v173
    %190 = vst [vmem:[#allocation2 + $0x190] sm:$0xff] %v174
    %191 = vst [vmem:[#allocation2 + $0x198] sm:$0xff] %v175
    %192 = vset.pattern.permute.xlu0 1
    %193 = vperm.xlu0 %192, %v27
    %v194 = vpop.permute.xlu0 %193
    %195 = vset.pattern.permute.xlu0 1
    %196 = vperm.xlu0 %195, %v28
    %v197 = vpop.permute.xlu0 %196
    %198 = vset.pattern.permute.xlu0 1
    %199 = vperm.xlu0 %198, %v29
    %v200 = vpop.permute.xlu0 %199
    %201 = vset.pattern.permute.xlu0 1
    %202 = vperm.xlu0 %201, %v30
    %v203 = vpop.permute.xlu0 %202
    %204 = vset.pattern.permute.xlu0 1
    %205 = vperm.xlu0 %204, %v31
    %v206 = vpop.permute.xlu0 %205
    %207 = vset.pattern.permute.xlu0 1
    %208 = vperm.xlu0 %207, %v32
    %v209 = vpop.permute.xlu0 %208
    %210 = vset.pattern.permute.xlu0 1
    %211 = vperm.xlu0 %210, %v33
    %v212 = vpop.permute.xlu0 %211
    %213 = vset.pattern.permute.xlu0 1
    %214 = vperm.xlu0 %213, %v34
    %v215 = vpop.permute.xlu0 %214
    %vm216 = vcmp.eq.s32.totalorder %v36, %v194
    %vm217 = vcmp.eq.s32.totalorder %v37, %v194
    %vm218 = vcmp.eq.s32.totalorder %v38, %v194
    %vm219 = vcmp.eq.s32.totalorder %v39, %v194
    %vm220 = vcmp.eq.s32.totalorder %v36, %v197
    %vm221 = vcmp.eq.s32.totalorder %v37, %v197
    %vm222 = vcmp.eq.s32.totalorder %v38, %v197
    %vm223 = vcmp.eq.s32.totalorder %v39, %v197
    %vm224 = vcmp.eq.s32.totalorder %v36, %v200
    %vm225 = vcmp.eq.s32.totalorder %v37, %v200
    %vm226 = vcmp.eq.s32.totalorder %v38, %v200
    %vm227 = vcmp.eq.s32.totalorder %v39, %v200
    %vm228 = vcmp.eq.s32.totalorder %v36, %v203
    %vm229 = vcmp.eq.s32.totalorder %v37, %v203
    %vm230 = vcmp.eq.s32.totalorder %v38, %v203
    %vm231 = vcmp.eq.s32.totalorder %v39, %v203
    %vm232 = vcmp.eq.s32.totalorder %v36, %v206
    %vm233 = vcmp.eq.s32.totalorder %v37, %v206
    %vm234 = vcmp.eq.s32.totalorder %v38, %v206
    %vm235 = vcmp.eq.s32.totalorder %v39, %v206
    %vm236 = vcmp.eq.s32.totalorder %v36, %v209
    %vm237 = vcmp.eq.s32.totalorder %v37, %v209
    %vm238 = vcmp.eq.s32.totalorder %v38, %v209
    %vm239 = vcmp.eq.s32.totalorder %v39, %v209
    %vm240 = vcmp.eq.s32.totalorder %v36, %v212
    %vm241 = vcmp.eq.s32.totalorder %v37, %v212
    %vm242 = vcmp.eq.s32.totalorder %v38, %v212
    %vm243 = vcmp.eq.s32.totalorder %v39, %v212
    %vm244 = vcmp.eq.s32.totalorder %v36, %v215
    %vm245 = vcmp.eq.s32.totalorder %v37, %v215
    %vm246 = vcmp.eq.s32.totalorder %v38, %v215
    %vm247 = vcmp.eq.s32.totalorder %v39, %v215
    %v248 = vsel %vm216, 1, 0
    %v249 = vsel %vm217, 1, 0
    %v250 = vsel %vm218, 1, 0
    %v251 = vsel %vm219, 1, 0
    %v252 = vsel %vm220, 1, 0
    %v253 = vsel %vm221, 1, 0
    %v254 = vsel %vm222, 1, 0
    %v255 = vsel %vm223, 1, 0
    %v256 = vsel %vm224, 1, 0
    %v257 = vsel %vm225, 1, 0
    %v258 = vsel %vm226, 1, 0
    %v259 = vsel %vm227, 1, 0
    %v260 = vsel %vm228, 1, 0
    %v261 = vsel %vm229, 1, 0
    %v262 = vsel %vm230, 1, 0
    %v263 = vsel %vm231, 1, 0
    %v264 = vsel %vm232, 1, 0
    %v265 = vsel %vm233, 1, 0
    %v266 = vsel %vm234, 1, 0
    %v267 = vsel %vm235, 1, 0
    %v268 = vsel %vm236, 1, 0
    %v269 = vsel %vm237, 1, 0
    %v270 = vsel %vm238, 1, 0
    %v271 = vsel %vm239, 1, 0
    %v272 = vsel %vm240, 1, 0
    %v273 = vsel %vm241, 1, 0
    %v274 = vsel %vm242, 1, 0
    %v275 = vsel %vm243, 1, 0
    %v276 = vsel %vm244, 1, 0
    %v277 = vsel %vm245, 1, 0
    %v278 = vsel %vm246, 1, 0
    %v279 = vsel %vm247, 1, 0
    %v280 = vcvt.s32.f32 %v248
    %v281 = vcvt.s32.f32 %v249
    %v282 = vcvt.s32.f32 %v250
    %v283 = vcvt.s32.f32 %v251
    %v284 = vcvt.s32.f32 %v252
    %v285 = vcvt.s32.f32 %v253
    %v286 = vcvt.s32.f32 %v254
    %v287 = vcvt.s32.f32 %v255
    %v288 = vcvt.s32.f32 %v256
    %v289 = vcvt.s32.f32 %v257
    %v290 = vcvt.s32.f32 %v258
    %v291 = vcvt.s32.f32 %v259
    %v292 = vcvt.s32.f32 %v260
    %v293 = vcvt.s32.f32 %v261
    %v294 = vcvt.s32.f32 %v262
    %v295 = vcvt.s32.f32 %v263
    %v296 = vcvt.s32.f32 %v264
    %v297 = vcvt.s32.f32 %v265
    %v298 = vcvt.s32.f32 %v266
    %v299 = vcvt.s32.f32 %v267
    %v300 = vcvt.s32.f32 %v268
    %v301 = vcvt.s32.f32 %v269
    %v302 = vcvt.s32.f32 %v270
    %v303 = vcvt.s32.f32 %v271
    %v304 = vcvt.s32.f32 %v272
    %v305 = vcvt.s32.f32 %v273
    %v306 = vcvt.s32.f32 %v274
    %v307 = vcvt.s32.f32 %v275
    %v308 = vcvt.s32.f32 %v276
    %v309 = vcvt.s32.f32 %v277
    %v310 = vcvt.s32.f32 %v278
    %v311 = vcvt.s32.f32 %v279
    %v312 = vpack.c.bf16 %v284, %v280
    %v313 = vpack.c.bf16 %v285, %v281
    %v314 = vpack.c.bf16 %v286, %v282
    %v315 = vpack.c.bf16 %v287, %v283
    %v316 = vpack.c.bf16 %v292, %v288
    %v317 = vpack.c.bf16 %v293, %v289
    %v318 = vpack.c.bf16 %v294, %v290
    %v319 = vpack.c.bf16 %v295, %v291
    %v320 = vpack.c.bf16 %v300, %v296
    %v321 = vpack.c.bf16 %v301, %v297
    %v322 = vpack.c.bf16 %v302, %v298
    %v323 = vpack.c.bf16 %v303, %v299
    %v324 = vpack.c.bf16 %v308, %v304
    %v325 = vpack.c.bf16 %v309, %v305
    %v326 = vpack.c.bf16 %v310, %v306
    %v327 = vpack.c.bf16 %v311, %v307
    %328 = vst [vmem:[#allocation2 + $0x20] sm:$0xff] %v312
    %329 = vst [vmem:[#allocation2 + $0x28] sm:$0xff] %v313
    %330 = vst [vmem:[#allocation2 + $0x30] sm:$0xff] %v314
    %331 = vst [vmem:[#allocation2 + $0x38] sm:$0xff] %v315
    %332 = vst [vmem:[#allocation2 + $0xa0] sm:$0xff] %v316
    %333 = vst [vmem:[#allocation2 + $0xa8] sm:$0xff] %v317
    %334 = vst [vmem:[#allocation2 + $0xb0] sm:$0xff] %v318
    %335 = vst [vmem:[#allocation2 + $0xb8] sm:$0xff] %v319
    %336 = vst [vmem:[#allocation2 + $0x120] sm:$0xff] %v320
    %337 = vst [vmem:[#allocation2 + $0x128] sm:$0xff] %v321
    %338 = vst [vmem:[#allocation2 + $0x130] sm:$0xff] %v322
    %339 = vst [vmem:[#allocation2 + $0x138] sm:$0xff] %v323
    %340 = vst [vmem:[#allocation2 + $0x1a0] sm:$0xff] %v324
    %341 = vst [vmem:[#allocation2 + $0x1a8] sm:$0xff] %v325
    %342 = vst [vmem:[#allocation2 + $0x1b0] sm:$0xff] %v326
    %343 = vst [vmem:[#allocation2 + $0x1b8] sm:$0xff] %v327
    %344 = vset.pattern.permute.xlu0 2
    %345 = vperm.xlu0 %344, %v27
    %v346 = vpop.permute.xlu0 %345
    %347 = vset.pattern.permute.xlu0 2
    %348 = vperm.xlu0 %347, %v28
    %v349 = vpop.permute.xlu0 %348
    %350 = vset.pattern.permute.xlu0 2
    %351 = vperm.xlu0 %350, %v29
    %v352 = vpop.permute.xlu0 %351
    %353 = vset.pattern.permute.xlu0 2
    %354 = vperm.xlu0 %353, %v30
    %v355 = vpop.permute.xlu0 %354
    %356 = vset.pattern.permute.xlu0 2
    %357 = vperm.xlu0 %356, %v31
    %v358 = vpop.permute.xlu0 %357
    %359 = vset.pattern.permute.xlu0 2
    %360 = vperm.xlu0 %359, %v32
    %v361 = vpop.permute.xlu0 %360
    %362 = vset.pattern.permute.xlu0 2
    %363 = vperm.xlu0 %362, %v33
    %v364 = vpop.permute.xlu0 %363
    %365 = vset.pattern.permute.xlu0 2
    %366 = vperm.xlu0 %365, %v34
    %v367 = vpop.permute.xlu0 %366
    %vm368 = vcmp.eq.s32.totalorder %v36, %v346
    %vm369 = vcmp.eq.s32.totalorder %v37, %v346
    %vm370 = vcmp.eq.s32.totalorder %v38, %v346
    %vm371 = vcmp.eq.s32.totalorder %v39, %v346
    %vm372 = vcmp.eq.s32.totalorder %v36, %v349
    %vm373 = vcmp.eq.s32.totalorder %v37, %v349
    %vm374 = vcmp.eq.s32.totalorder %v38, %v349
    %vm375 = vcmp.eq.s32.totalorder %v39, %v349
    %vm376 = vcmp.eq.s32.totalorder %v36, %v352
    %vm377 = vcmp.eq.s32.totalorder %v37, %v352
    %vm378 = vcmp.eq.s32.totalorder %v38, %v352
    %vm379 = vcmp.eq.s32.totalorder %v39, %v352
    %vm380 = vcmp.eq.s32.totalorder %v36, %v355
    %vm381 = vcmp.eq.s32.totalorder %v37, %v355
    %vm382 = vcmp.eq.s32.totalorder %v38, %v355
    %vm383 = vcmp.eq.s32.totalorder %v39, %v355
    %vm384 = vcmp.eq.s32.totalorder %v36, %v358
    %vm385 = vcmp.eq.s32.totalorder %v37, %v358
    %vm386 = vcmp.eq.s32.totalorder %v38, %v358
    %vm387 = vcmp.eq.s32.totalorder %v39, %v358
    %vm388 = vcmp.eq.s32.totalorder %v36, %v361
    %vm389 = vcmp.eq.s32.totalorder %v37, %v361
    %vm390 = vcmp.eq.s32.totalorder %v38, %v361
    %vm391 = vcmp.eq.s32.totalorder %v39, %v361
    %vm392 = vcmp.eq.s32.totalorder %v36, %v364
    %vm393 = vcmp.eq.s32.totalorder %v37, %v364
    %vm394 = vcmp.eq.s32.totalorder %v38, %v364
    %vm395 = vcmp.eq.s32.totalorder %v39, %v364
    %vm396 = vcmp.eq.s32.totalorder %v36, %v367
    %vm397 = vcmp.eq.s32.totalorder %v37, %v367
    %vm398 = vcmp.eq.s32.totalorder %v38, %v367
    %vm399 = vcmp.eq.s32.totalorder %v39, %v367
    %v400 = vsel %vm368, 1, 0
    %v401 = vsel %vm369, 1, 0
    %v402 = vsel %vm370, 1, 0
    %v403 = vsel %vm371, 1, 0
    %v404 = vsel %vm372, 1, 0
    %v405 = vsel %vm373, 1, 0
    %v406 = vsel %vm374, 1, 0
    %v407 = vsel %vm375, 1, 0
    %v408 = vsel %vm376, 1, 0
    %v409 = vsel %vm377, 1, 0
    %v410 = vsel %vm378, 1, 0
    %v411 = vsel %vm379, 1, 0
    %v412 = vsel %vm380, 1, 0
    %v413 = vsel %vm381, 1, 0
    %v414 = vsel %vm382, 1, 0
    %v415 = vsel %vm383, 1, 0
    %v416 = vsel %vm384, 1, 0
    %v417 = vsel %vm385, 1, 0
    %v418 = vsel %vm386, 1, 0
    %v419 = vsel %vm387, 1, 0
    %v420 = vsel %vm388, 1, 0
    %v421 = vsel %vm389, 1, 0
    %v422 = vsel %vm390, 1, 0
    %v423 = vsel %vm391, 1, 0
    %v424 = vsel %vm392, 1, 0
    %v425 = vsel %vm393, 1, 0
    %v426 = vsel %vm394, 1, 0
    %v427 = vsel %vm395, 1, 0
    %v428 = vsel %vm396, 1, 0
    %v429 = vsel %vm397, 1, 0
    %v430 = vsel %vm398, 1, 0
    %v431 = vsel %vm399, 1, 0
    %v432 = vcvt.s32.f32 %v400
    %v433 = vcvt.s32.f32 %v401
    %v434 = vcvt.s32.f32 %v402
    %v435 = vcvt.s32.f32 %v403
    %v436 = vcvt.s32.f32 %v404
    %v437 = vcvt.s32.f32 %v405
    %v438 = vcvt.s32.f32 %v406
    %v439 = vcvt.s32.f32 %v407
    %v440 = vcvt.s32.f32 %v408
    %v441 = vcvt.s32.f32 %v409
    %v442 = vcvt.s32.f32 %v410
    %v443 = vcvt.s32.f32 %v411
    %v444 = vcvt.s32.f32 %v412
    %v445 = vcvt.s32.f32 %v413
    %v446 = vcvt.s32.f32 %v414
    %v447 = vcvt.s32.f32 %v415
    %v448 = vcvt.s32.f32 %v416
    %v449 = vcvt.s32.f32 %v417
    %v450 = vcvt.s32.f32 %v418
    %v451 = vcvt.s32.f32 %v419
    %v452 = vcvt.s32.f32 %v420
    %v453 = vcvt.s32.f32 %v421
    %v454 = vcvt.s32.f32 %v422
    %v455 = vcvt.s32.f32 %v423
    %v456 = vcvt.s32.f32 %v424
    %v457 = vcvt.s32.f32 %v425
    %v458 = vcvt.s32.f32 %v426
    %v459 = vcvt.s32.f32 %v427
    %v460 = vcvt.s32.f32 %v428
    %v461 = vcvt.s32.f32 %v429
    %v462 = vcvt.s32.f32 %v430
    %v463 = vcvt.s32.f32 %v431
    %v464 = vpack.c.bf16 %v436, %v432
    %v465 = vpack.c.bf16 %v437, %v433
    %v466 = vpack.c.bf16 %v438, %v434
    %v467 = vpack.c.bf16 %v439, %v435
    %v468 = vpack.c.bf16 %v444, %v440
    %v469 = vpack.c.bf16 %v445, %v441
    %v470 = vpack.c.bf16 %v446, %v442
    %v471 = vpack.c.bf16 %v447, %v443
    %v472 = vpack.c.bf16 %v452, %v448
    %v473 = vpack.c.bf16 %v453, %v449
    %v474 = vpack.c.bf16 %v454, %v450
    %v475 = vpack.c.bf16 %v455, %v451
    %v476 = vpack.c.bf16 %v460, %v456
    %v477 = vpack.c.bf16 %v461, %v457
    %v478 = vpack.c.bf16 %v462, %v458
    %v479 = vpack.c.bf16 %v463, %v459
    %480 = vst [vmem:[#allocation2 + $0x40] sm:$0xff] %v464
    %481 = vst [vmem:[#allocation2 + $0x48] sm:$0xff] %v465
    %482 = vst [vmem:[#allocation2 + $0x50] sm:$0xff] %v466
    %483 = vst [vmem:[#allocation2 + $0x58] sm:$0xff] %v467
    %484 = vst [vmem:[#allocation2 + $0xc0] sm:$0xff] %v468
    %485 = vst [vmem:[#allocation2 + $0xc8] sm:$0xff] %v469
    %486 = vst [vmem:[#allocation2 + $0xd0] sm:$0xff] %v470
    %487 = vst [vmem:[#allocation2 + $0xd8] sm:$0xff] %v471
    %488 = vst [vmem:[#allocation2 + $0x140] sm:$0xff] %v472
    %489 = vst [vmem:[#allocation2 + $0x148] sm:$0xff] %v473
    %490 = vst [vmem:[#allocation2 + $0x150] sm:$0xff] %v474
    %491 = vst [vmem:[#allocation2 + $0x158] sm:$0xff] %v475
    %492 = vst [vmem:[#allocation2 + $0x1c0] sm:$0xff] %v476
    %493 = vst [vmem:[#allocation2 + $0x1c8] sm:$0xff] %v477
    %494 = vst [vmem:[#allocation2 + $0x1d0] sm:$0xff] %v478
    %495 = vst [vmem:[#allocation2 + $0x1d8] sm:$0xff] %v479
    %496 = vset.pattern.permute.xlu0 3
    %497 = vperm.xlu0 %496, %v27
    %v498 = vpop.permute.xlu0 %497
    %499 = vset.pattern.permute.xlu0 3
    %500 = vperm.xlu0 %499, %v28
    %v501 = vpop.permute.xlu0 %500
    %502 = vset.pattern.permute.xlu0 3
    %503 = vperm.xlu0 %502, %v29
    %v504 = vpop.permute.xlu0 %503
    %505 = vset.pattern.permute.xlu0 3
    %506 = vperm.xlu0 %505, %v30
    %v507 = vpop.permute.xlu0 %506
    %508 = vset.pattern.permute.xlu0 3
    %509 = vperm.xlu0 %508, %v31
    %v510 = vpop.permute.xlu0 %509
    %511 = vset.pattern.permute.xlu0 3
    %512 = vperm.xlu0 %511, %v32
    %v513 = vpop.permute.xlu0 %512
    %514 = vset.pattern.permute.xlu0 3
    %515 = vperm.xlu0 %514, %v33
    %v516 = vpop.permute.xlu0 %515
    %517 = vset.pattern.permute.xlu0 3
    %518 = vperm.xlu0 %517, %v34
    %v519 = vpop.permute.xlu0 %518
    %vm520 = vcmp.eq.s32.totalorder %v36, %v498
    %vm521 = vcmp.eq.s32.totalorder %v37, %v498
    %vm522 = vcmp.eq.s32.totalorder %v38, %v498
    %vm523 = vcmp.eq.s32.totalorder %v39, %v498
    %vm524 = vcmp.eq.s32.totalorder %v36, %v501
    %vm525 = vcmp.eq.s32.totalorder %v37, %v501
    %vm526 = vcmp.eq.s32.totalorder %v38, %v501
    %vm527 = vcmp.eq.s32.totalorder %v39, %v501
    %vm528 = vcmp.eq.s32.totalorder %v36, %v504
    %vm529 = vcmp.eq.s32.totalorder %v37, %v504
    %vm530 = vcmp.eq.s32.totalorder %v38, %v504
    %vm531 = vcmp.eq.s32.totalorder %v39, %v504
    %vm532 = vcmp.eq.s32.totalorder %v36, %v507
    %vm533 = vcmp.eq.s32.totalorder %v37, %v507
    %vm534 = vcmp.eq.s32.totalorder %v38, %v507
    %vm535 = vcmp.eq.s32.totalorder %v39, %v507
    %vm536 = vcmp.eq.s32.totalorder %v36, %v510
    %vm537 = vcmp.eq.s32.totalorder %v37, %v510
    %vm538 = vcmp.eq.s32.totalorder %v38, %v510
    %vm539 = vcmp.eq.s32.totalorder %v39, %v510
    %vm540 = vcmp.eq.s32.totalorder %v36, %v513
    %vm541 = vcmp.eq.s32.totalorder %v37, %v513
    %vm542 = vcmp.eq.s32.totalorder %v38, %v513
    %vm543 = vcmp.eq.s32.totalorder %v39, %v513
    %vm544 = vcmp.eq.s32.totalorder %v36, %v516
    %vm545 = vcmp.eq.s32.totalorder %v37, %v516
    %vm546 = vcmp.eq.s32.totalorder %v38, %v516
    %vm547 = vcmp.eq.s32.totalorder %v39, %v516
    %vm548 = vcmp.eq.s32.totalorder %v36, %v519
    %vm549 = vcmp.eq.s32.totalorder %v37, %v519
    %vm550 = vcmp.eq.s32.totalorder %v38, %v519
    %vm551 = vcmp.eq.s32.totalorder %v39, %v519
    %v552 = vsel %vm520, 1, 0
    %v553 = vsel %vm521, 1, 0
    %v554 = vsel %vm522, 1, 0
    %v555 = vsel %vm523, 1, 0
    %v556 = vsel %vm524, 1, 0
    %v557 = vsel %vm525, 1, 0
    %v558 = vsel %vm526, 1, 0
    %v559 = vsel %vm527, 1, 0
    %v560 = vsel %vm528, 1, 0
    %v561 = vsel %vm529, 1, 0
    %v562 = vsel %vm530, 1, 0
    %v563 = vsel %vm531, 1, 0
    %v564 = vsel %vm532, 1, 0
    %v565 = vsel %vm533, 1, 0
    %v566 = vsel %vm534, 1, 0
    %v567 = vsel %vm535, 1, 0
    %v568 = vsel %vm536, 1, 0
    %v569 = vsel %vm537, 1, 0
    %v570 = vsel %vm538, 1, 0
    %v571 = vsel %vm539, 1, 0
    %v572 = vsel %vm540, 1, 0
    %v573 = vsel %vm541, 1, 0
    %v574 = vsel %vm542, 1, 0
    %v575 = vsel %vm543, 1, 0
    %v576 = vsel %vm544, 1, 0
    %v577 = vsel %vm545, 1, 0
    %v578 = vsel %vm546, 1, 0
    %v579 = vsel %vm547, 1, 0
    %v580 = vsel %vm548, 1, 0
    %v581 = vsel %vm549, 1, 0
    %v582 = vsel %vm550, 1, 0
    %v583 = vsel %vm551, 1, 0
    %v584 = vcvt.s32.f32 %v552
    %v585 = vcvt.s32.f32 %v553
    %v586 = vcvt.s32.f32 %v554
    %v587 = vcvt.s32.f32 %v555
    %v588 = vcvt.s32.f32 %v556
    %v589 = vcvt.s32.f32 %v557
    %v590 = vcvt.s32.f32 %v558
    %v591 = vcvt.s32.f32 %v559
    %v592 = vcvt.s32.f32 %v560
    %v593 = vcvt.s32.f32 %v561
    %v594 = vcvt.s32.f32 %v562
    %v595 = vcvt.s32.f32 %v563
    %v596 = vcvt.s32.f32 %v564
    %v597 = vcvt.s32.f32 %v565
    %v598 = vcvt.s32.f32 %v566
    %v599 = vcvt.s32.f32 %v567
    %v600 = vcvt.s32.f32 %v568
    %v601 = vcvt.s32.f32 %v569
    %v602 = vcvt.s32.f32 %v570
    %v603 = vcvt.s32.f32 %v571
    %v604 = vcvt.s32.f32 %v572
    %v605 = vcvt.s32.f32 %v573
    %v606 = vcvt.s32.f32 %v574
    %v607 = vcvt.s32.f32 %v575
    %v608 = vcvt.s32.f32 %v576
    %v609 = vcvt.s32.f32 %v577
    %v610 = vcvt.s32.f32 %v578
    %v611 = vcvt.s32.f32 %v579
    %v612 = vcvt.s32.f32 %v580
    %v613 = vcvt.s32.f32 %v581
    %v614 = vcvt.s32.f32 %v582
    %v615 = vcvt.s32.f32 %v583
    %v616 = vpack.c.bf16 %v588, %v584
    %v617 = vpack.c.bf16 %v589, %v585
    %v618 = vpack.c.bf16 %v590, %v586
    %v619 = vpack.c.bf16 %v591, %v587
    %v620 = vpack.c.bf16 %v596, %v592
    %v621 = vpack.c.bf16 %v597, %v593
    %v622 = vpack.c.bf16 %v598, %v594
    %v623 = vpack.c.bf16 %v599, %v595
    %v624 = vpack.c.bf16 %v604, %v600
    %v625 = vpack.c.bf16 %v605, %v601
    %v626 = vpack.c.bf16 %v606, %v602
    %v627 = vpack.c.bf16 %v607, %v603
    %v628 = vpack.c.bf16 %v612, %v608
    %v629 = vpack.c.bf16 %v613, %v609
    %v630 = vpack.c.bf16 %v614, %v610
    %v631 = vpack.c.bf16 %v615, %v611
    %632 = vst [vmem:[#allocation2 + $0x60] sm:$0xff] %v616
    %633 = vst [vmem:[#allocation2 + $0x68] sm:$0xff] %v617
    %634 = vst [vmem:[#allocation2 + $0x70] sm:$0xff] %v618
    %635 = vst [vmem:[#allocation2 + $0x78] sm:$0xff] %v619
    %636 = vst [vmem:[#allocation2 + $0xe0] sm:$0xff] %v620
    %637 = vst [vmem:[#allocation2 + $0xe8] sm:$0xff] %v621
    %638 = vst [vmem:[#allocation2 + $0xf0] sm:$0xff] %v622
    %639 = vst [vmem:[#allocation2 + $0xf8] sm:$0xff] %v623
    %640 = vst [vmem:[#allocation2 + $0x160] sm:$0xff] %v624
    %641 = vst [vmem:[#allocation2 + $0x168] sm:$0xff] %v625
    %642 = vst [vmem:[#allocation2 + $0x170] sm:$0xff] %v626
    %643 = vst [vmem:[#allocation2 + $0x178] sm:$0xff] %v627
    %644 = vst [vmem:[#allocation2 + $0x1e0] sm:$0xff] %v628
    %645 = vst [vmem:[#allocation2 + $0x1e8] sm:$0xff] %v629
    %646 = vst [vmem:[#allocation2 + $0x1f0] sm:$0xff] %v630
    %647 = vst [vmem:[#allocation2 + $0x1f8] sm:$0xff] %v631
    %v648 = vld [vmem:[#allocation2] sm:$0xff]
    %v649 = vld [vmem:[#allocation2 + $0x8] sm:$0xff]
    %v650 = vld [vmem:[#allocation2 + $0x10] sm:$0xff]
    %v651 = vld [vmem:[#allocation2 + $0x18] sm:$0xff]
    %v652 = vld [vmem:[#allocation2 + $0x20] sm:$0xff]
    %v653 = vld [vmem:[#allocation2 + $0x28] sm:$0xff]
    %v654 = vld [vmem:[#allocation2 + $0x30] sm:$0xff]
    %v655 = vld [vmem:[#allocation2 + $0x38] sm:$0xff]
    %v656 = vld [vmem:[#allocation2 + $0x40] sm:$0xff]
    %v657 = vld [vmem:[#allocation2 + $0x48] sm:$0xff]
    %v658 = vld [vmem:[#allocation2 + $0x50] sm:$0xff]
    %v659 = vld [vmem:[#allocation2 + $0x58] sm:$0xff]
    %v660 = vld [vmem:[#allocation2 + $0x60] sm:$0xff]
    %v661 = vld [vmem:[#allocation2 + $0x68] sm:$0xff]
    %v662 = vld [vmem:[#allocation2 + $0x70] sm:$0xff]
    %v663 = vld [vmem:[#allocation2 + $0x78] sm:$0xff]
    %v664 = vld [vmem:[#allocation2 + $0x80] sm:$0xff]
    %v665 = vld [vmem:[#allocation2 + $0x88] sm:$0xff]
    %v666 = vld [vmem:[#allocation2 + $0x90] sm:$0xff]
    %v667 = vld [vmem:[#allocation2 + $0x98] sm:$0xff]
    %v668 = vld [vmem:[#allocation2 + $0xa0] sm:$0xff]
    %v669 = vld [vmem:[#allocation2 + $0xa8] sm:$0xff]
    %v670 = vld [vmem:[#allocation2 + $0xb0] sm:$0xff]
    %v671 = vld [vmem:[#allocation2 + $0xb8] sm:$0xff]
    %v672 = vld [vmem:[#allocation2 + $0xc0] sm:$0xff]
    %v673 = vld [vmem:[#allocation2 + $0xc8] sm:$0xff]
    %v674 = vld [vmem:[#allocation2 + $0xd0] sm:$0xff]
    %v675 = vld [vmem:[#allocation2 + $0xd8] sm:$0xff]
    %v676 = vld [vmem:[#allocation2 + $0xe0] sm:$0xff]
    %v677 = vld [vmem:[#allocation2 + $0xe8] sm:$0xff]
    %v678 = vld [vmem:[#allocation2 + $0xf0] sm:$0xff]
    %v679 = vld [vmem:[#allocation2 + $0xf8] sm:$0xff]
    %v680 = vld [vmem:[#allocation2 + $0x100] sm:$0xff]
    %v681 = vld [vmem:[#allocation2 + $0x108] sm:$0xff]
    %v682 = vld [vmem:[#allocation2 + $0x110] sm:$0xff]
    %v683 = vld [vmem:[#allocation2 + $0x118] sm:$0xff]
    %v684 = vld [vmem:[#allocation2 + $0x120] sm:$0xff]
    %v685 = vld [vmem:[#allocation2 + $0x128] sm:$0xff]
    %v686 = vld [vmem:[#allocation2 + $0x130] sm:$0xff]
    %v687 = vld [vmem:[#allocation2 + $0x138] sm:$0xff]
    %v688 = vld [vmem:[#allocation2 + $0x140] sm:$0xff]
    %v689 = vld [vmem:[#allocation2 + $0x148] sm:$0xff]
    %v690 = vld [vmem:[#allocation2 + $0x150] sm:$0xff]
    %v691 = vld [vmem:[#allocation2 + $0x158] sm:$0xff]
    %v692 = vld [vmem:[#allocation2 + $0x160] sm:$0xff]
    %v693 = vld [vmem:[#allocation2 + $0x168] sm:$0xff]
    %v694 = vld [vmem:[#allocation2 + $0x170] sm:$0xff]
    %v695 = vld [vmem:[#allocation2 + $0x178] sm:$0xff]
    %v696 = vld [vmem:[#allocation2 + $0x180] sm:$0xff]
    %v697 = vld [vmem:[#allocation2 + $0x188] sm:$0xff]
    %v698 = vld [vmem:[#allocation2 + $0x190] sm:$0xff]
    %v699 = vld [vmem:[#allocation2 + $0x198] sm:$0xff]
    %v700 = vld [vmem:[#allocation2 + $0x1a0] sm:$0xff]
    %v701 = vld [vmem:[#allocation2 + $0x1a8] sm:$0xff]
    %v702 = vld [vmem:[#allocation2 + $0x1b0] sm:$0xff]
    %v703 = vld [vmem:[#allocation2 + $0x1b8] sm:$0xff]
    %v704 = vld [vmem:[#allocation2 + $0x1c0] sm:$0xff]
    %v705 = vld [vmem:[#allocation2 + $0x1c8] sm:$0xff]
    %v706 = vld [vmem:[#allocation2 + $0x1d0] sm:$0xff]
    %v707 = vld [vmem:[#allocation2 + $0x1d8] sm:$0xff]
    %v708 = vld [vmem:[#allocation2 + $0x1e0] sm:$0xff]
    %v709 = vld [vmem:[#allocation2 + $0x1e8] sm:$0xff]
    %v710 = vld [vmem:[#allocation2 + $0x1f0] sm:$0xff]
    %v711 = vld [vmem:[#allocation2 + $0x1f8] sm:$0xff]
    %v712 = vld [vmem:[#allocation3] sm:$0xf]
    %v713 = vld [vmem:[#allocation3 + $0x4] sm:$0xf]
    %v714 = vld [vmem:[#allocation3 + $0x8] sm:$0xf]
    %v715 = vld [vmem:[#allocation3 + $0xc] sm:$0xf]
    %v716 = vld [vmem:[#allocation3 + $0x10] sm:$0xf]
    %v717 = vld [vmem:[#allocation3 + $0x14] sm:$0xf]
    %v718 = vld [vmem:[#allocation3 + $0x18] sm:$0xf]
    %v719 = vld [vmem:[#allocation3 + $0x1c] sm:$0xf]
    %v720 = vld [vmem:[#allocation3 + $0x20] sm:$0xf]
    %v721 = vld [vmem:[#allocation3 + $0x24] sm:$0xf]
    %v722 = vld [vmem:[#allocation3 + $0x28] sm:$0xf]
    %v723 = vld [vmem:[#allocation3 + $0x2c] sm:$0xf]
    %v724 = vld [vmem:[#allocation3 + $0x30] sm:$0xf]
    %v725 = vld [vmem:[#allocation3 + $0x34] sm:$0xf]
    %v726 = vld [vmem:[#allocation3 + $0x38] sm:$0xf]
    %v727 = vld [vmem:[#allocation3 + $0x3c] sm:$0xf]
    %v728 = vld [vmem:[#allocation3 + $0x40] sm:$0xf]
    %v729 = vld [vmem:[#allocation3 + $0x44] sm:$0xf]
    %v730 = vld [vmem:[#allocation3 + $0x48] sm:$0xf]
    %v731 = vld [vmem:[#allocation3 + $0x4c] sm:$0xf]
    %v732 = vld [vmem:[#allocation3 + $0x50] sm:$0xf]
    %v733 = vld [vmem:[#allocation3 + $0x54] sm:$0xf]
    %v734 = vld [vmem:[#allocation3 + $0x58] sm:$0xf]
    %v735 = vld [vmem:[#allocation3 + $0x5c] sm:$0xf]
    %v736 = vld [vmem:[#allocation3 + $0x60] sm:$0xf]
    %v737 = vld [vmem:[#allocation3 + $0x64] sm:$0xf]
    %v738 = vld [vmem:[#allocation3 + $0x68] sm:$0xf]
    %v739 = vld [vmem:[#allocation3 + $0x6c] sm:$0xf]
    %v740 = vld [vmem:[#allocation3 + $0x70] sm:$0xf]
    %v741 = vld [vmem:[#allocation3 + $0x74] sm:$0xf]
    %v742 = vld [vmem:[#allocation3 + $0x78] sm:$0xf]
    %v743 = vld [vmem:[#allocation3 + $0x7c] sm:$0xf]
    %v744 = vld [vmem:[#allocation3 + $0x80] sm:$0xf]
    %v745 = vld [vmem:[#allocation3 + $0x84] sm:$0xf]
    %v746 = vld [vmem:[#allocation3 + $0x88] sm:$0xf]
    %v747 = vld [vmem:[#allocation3 + $0x8c] sm:$0xf]
    %v748 = vld [vmem:[#allocation3 + $0x90] sm:$0xf]
    %v749 = vld [vmem:[#allocation3 + $0x94] sm:$0xf]
    %v750 = vld [vmem:[#allocation3 + $0x98] sm:$0xf]
    %v751 = vld [vmem:[#allocation3 + $0x9c] sm:$0xf]
    %v752 = vld [vmem:[#allocation3 + $0xa0] sm:$0xf]
    %v753 = vld [vmem:[#allocation3 + $0xa4] sm:$0xf]
    %v754 = vld [vmem:[#allocation3 + $0xa8] sm:$0xf]
    %v755 = vld [vmem:[#allocation3 + $0xac] sm:$0xf]
    %v756 = vld [vmem:[#allocation3 + $0xb0] sm:$0xf]
    %v757 = vld [vmem:[#allocation3 + $0xb4] sm:$0xf]
    %v758 = vld [vmem:[#allocation3 + $0xb8] sm:$0xf]
    %v759 = vld [vmem:[#allocation3 + $0xbc] sm:$0xf]
    %v760 = vld [vmem:[#allocation3 + $0xc0] sm:$0xf]
    %v761 = vld [vmem:[#allocation3 + $0xc4] sm:$0xf]
    %v762 = vld [vmem:[#allocation3 + $0xc8] sm:$0xf]
    %v763 = vld [vmem:[#allocation3 + $0xcc] sm:$0xf]
    %v764 = vld [vmem:[#allocation3 + $0xd0] sm:$0xf]
    %v765 = vld [vmem:[#allocation3 + $0xd4] sm:$0xf]
    %v766 = vld [vmem:[#allocation3 + $0xd8] sm:$0xf]
    %v767 = vld [vmem:[#allocation3 + $0xdc] sm:$0xf]
    %v768 = vld [vmem:[#allocation3 + $0xe0] sm:$0xf]
    %v769 = vld [vmem:[#allocation3 + $0xe4] sm:$0xf]
    %v770 = vld [vmem:[#allocation3 + $0xe8] sm:$0xf]
    %v771 = vld [vmem:[#allocation3 + $0xec] sm:$0xf]
    %v772 = vld [vmem:[#allocation3 + $0xf0] sm:$0xf]
    %v773 = vld [vmem:[#allocation3 + $0xf4] sm:$0xf]
    %v774 = vld [vmem:[#allocation3 + $0xf8] sm:$0xf]
    %v775 = vld [vmem:[#allocation3 + $0xfc] sm:$0xf]
    %v776 = vld [vmem:[#allocation3 + $0x100] sm:$0xf]
    %v777 = vld [vmem:[#allocation3 + $0x104] sm:$0xf]
    %v778 = vld [vmem:[#allocation3 + $0x108] sm:$0xf]
    %v779 = vld [vmem:[#allocation3 + $0x10c] sm:$0xf]
    %v780 = vld [vmem:[#allocation3 + $0x110] sm:$0xf]
    %v781 = vld [vmem:[#allocation3 + $0x114] sm:$0xf]
    %v782 = vld [vmem:[#allocation3 + $0x118] sm:$0xf]
    %v783 = vld [vmem:[#allocation3 + $0x11c] sm:$0xf]
    %v784 = vld [vmem:[#allocation3 + $0x120] sm:$0xf]
    %v785 = vld [vmem:[#allocation3 + $0x124] sm:$0xf]
    %v786 = vld [vmem:[#allocation3 + $0x128] sm:$0xf]
    %v787 = vld [vmem:[#allocation3 + $0x12c] sm:$0xf]
    %v788 = vld [vmem:[#allocation3 + $0x130] sm:$0xf]
    %v789 = vld [vmem:[#allocation3 + $0x134] sm:$0xf]
    %v790 = vld [vmem:[#allocation3 + $0x138] sm:$0xf]
    %v791 = vld [vmem:[#allocation3 + $0x13c] sm:$0xf]
    %v792 = vld [vmem:[#allocation3 + $0x140] sm:$0xf]
    %v793 = vld [vmem:[#allocation3 + $0x144] sm:$0xf]
    %v794 = vld [vmem:[#allocation3 + $0x148] sm:$0xf]
    %v795 = vld [vmem:[#allocation3 + $0x14c] sm:$0xf]
    %v796 = vld [vmem:[#allocation3 + $0x150] sm:$0xf]
    %v797 = vld [vmem:[#allocation3 + $0x154] sm:$0xf]
    %v798 = vld [vmem:[#allocation3 + $0x158] sm:$0xf]
    %v799 = vld [vmem:[#allocation3 + $0x15c] sm:$0xf]
    %v800 = vld [vmem:[#allocation3 + $0x160] sm:$0xf]
    %v801 = vld [vmem:[#allocation3 + $0x164] sm:$0xf]
    %v802 = vld [vmem:[#allocation3 + $0x168] sm:$0xf]
    %v803 = vld [vmem:[#allocation3 + $0x16c] sm:$0xf]
    %v804 = vld [vmem:[#allocation3 + $0x170] sm:$0xf]
    %v805 = vld [vmem:[#allocation3 + $0x174] sm:$0xf]
    %v806 = vld [vmem:[#allocation3 + $0x178] sm:$0xf]
    %v807 = vld [vmem:[#allocation3 + $0x17c] sm:$0xf]
    %v808 = vld [vmem:[#allocation3 + $0x180] sm:$0xf]
    %v809 = vld [vmem:[#allocation3 + $0x184] sm:$0xf]
    %v810 = vld [vmem:[#allocation3 + $0x188] sm:$0xf]
    %v811 = vld [vmem:[#allocation3 + $0x18c] sm:$0xf]
    %v812 = vld [vmem:[#allocation3 + $0x190] sm:$0xf]
    %v813 = vld [vmem:[#allocation3 + $0x194] sm:$0xf]
    %v814 = vld [vmem:[#allocation3 + $0x198] sm:$0xf]
    %v815 = vld [vmem:[#allocation3 + $0x19c] sm:$0xf]
    %v816 = vld [vmem:[#allocation3 + $0x1a0] sm:$0xf]
    %v817 = vld [vmem:[#allocation3 + $0x1a4] sm:$0xf]
    %v818 = vld [vmem:[#allocation3 + $0x1a8] sm:$0xf]
    %v819 = vld [vmem:[#allocation3 + $0x1ac] sm:$0xf]
    %v820 = vld [vmem:[#allocation3 + $0x1b0] sm:$0xf]
    %v821 = vld [vmem:[#allocation3 + $0x1b4] sm:$0xf]
    %v822 = vld [vmem:[#allocation3 + $0x1b8] sm:$0xf]
    %v823 = vld [vmem:[#allocation3 + $0x1bc] sm:$0xf]
    %v824 = vld [vmem:[#allocation3 + $0x1c0] sm:$0xf]
    %v825 = vld [vmem:[#allocation3 + $0x1c4] sm:$0xf]
    %v826 = vld [vmem:[#allocation3 + $0x1c8] sm:$0xf]
    %v827 = vld [vmem:[#allocation3 + $0x1cc] sm:$0xf]
    %v828 = vld [vmem:[#allocation3 + $0x1d0] sm:$0xf]
    %v829 = vld [vmem:[#allocation3 + $0x1d4] sm:$0xf]
    %v830 = vld [vmem:[#allocation3 + $0x1d8] sm:$0xf]
    %v831 = vld [vmem:[#allocation3 + $0x1dc] sm:$0xf]
    %v832 = vld [vmem:[#allocation3 + $0x1e0] sm:$0xf]
    %v833 = vld [vmem:[#allocation3 + $0x1e4] sm:$0xf]
    %v834 = vld [vmem:[#allocation3 + $0x1e8] sm:$0xf]
    %v835 = vld [vmem:[#allocation3 + $0x1ec] sm:$0xf]
    %v836 = vld [vmem:[#allocation3 + $0x1f0] sm:$0xf]
    %v837 = vld [vmem:[#allocation3 + $0x1f4] sm:$0xf]
    %v838 = vld [vmem:[#allocation3 + $0x1f8] sm:$0xf]
    %v839 = vld [vmem:[#allocation3 + $0x1fc] sm:$0xf]
    %v840 = vld [vmem:[#allocation3 + $0x200] sm:$0xf]
    %v841 = vld [vmem:[#allocation3 + $0x204] sm:$0xf]
    %v842 = vld [vmem:[#allocation3 + $0x208] sm:$0xf]
    %v843 = vld [vmem:[#allocation3 + $0x20c] sm:$0xf]
    %v844 = vld [vmem:[#allocation3 + $0x210] sm:$0xf]
    %v845 = vld [vmem:[#allocation3 + $0x214] sm:$0xf]
    %v846 = vld [vmem:[#allocation3 + $0x218] sm:$0xf]
    %v847 = vld [vmem:[#allocation3 + $0x21c] sm:$0xf]
    %v848 = vld [vmem:[#allocation3 + $0x220] sm:$0xf]
    %v849 = vld [vmem:[#allocation3 + $0x224] sm:$0xf]
    %v850 = vld [vmem:[#allocation3 + $0x228] sm:$0xf]
    %v851 = vld [vmem:[#allocation3 + $0x22c] sm:$0xf]
    %v852 = vld [vmem:[#allocation3 + $0x230] sm:$0xf]
    %v853 = vld [vmem:[#allocation3 + $0x234] sm:$0xf]
    %v854 = vld [vmem:[#allocation3 + $0x238] sm:$0xf]
    %v855 = vld [vmem:[#allocation3 + $0x23c] sm:$0xf]
    %v856 = vld [vmem:[#allocation3 + $0x240] sm:$0xf]
    %v857 = vld [vmem:[#allocation3 + $0x244] sm:$0xf]
    %v858 = vld [vmem:[#allocation3 + $0x248] sm:$0xf]
    %v859 = vld [vmem:[#allocation3 + $0x24c] sm:$0xf]
    %v860 = vld [vmem:[#allocation3 + $0x250] sm:$0xf]
    %v861 = vld [vmem:[#allocation3 + $0x254] sm:$0xf]
    %v862 = vld [vmem:[#allocation3 + $0x258] sm:$0xf]
    %v863 = vld [vmem:[#allocation3 + $0x25c] sm:$0xf]
    %v864 = vld [vmem:[#allocation3 + $0x260] sm:$0xf]
    %v865 = vld [vmem:[#allocation3 + $0x264] sm:$0xf]
    %v866 = vld [vmem:[#allocation3 + $0x268] sm:$0xf]
    %v867 = vld [vmem:[#allocation3 + $0x26c] sm:$0xf]
    %v868 = vld [vmem:[#allocation3 + $0x270] sm:$0xf]
    %v869 = vld [vmem:[#allocation3 + $0x274] sm:$0xf]
    %v870 = vld [vmem:[#allocation3 + $0x278] sm:$0xf]
    %v871 = vld [vmem:[#allocation3 + $0x27c] sm:$0xf]
    %v872 = vld [vmem:[#allocation3 + $0x280] sm:$0xf]
    %v873 = vld [vmem:[#allocation3 + $0x284] sm:$0xf]
    %v874 = vld [vmem:[#allocation3 + $0x288] sm:$0xf]
    %v875 = vld [vmem:[#allocation3 + $0x28c] sm:$0xf]
    %v876 = vld [vmem:[#allocation3 + $0x290] sm:$0xf]
    %v877 = vld [vmem:[#allocation3 + $0x294] sm:$0xf]
    %v878 = vld [vmem:[#allocation3 + $0x298] sm:$0xf]
    %v879 = vld [vmem:[#allocation3 + $0x29c] sm:$0xf]
    %v880 = vld [vmem:[#allocation3 + $0x2a0] sm:$0xf]
    %v881 = vld [vmem:[#allocation3 + $0x2a4] sm:$0xf]
    %v882 = vld [vmem:[#allocation3 + $0x2a8] sm:$0xf]
    %v883 = vld [vmem:[#allocation3 + $0x2ac] sm:$0xf]
    %v884 = vld [vmem:[#allocation3 + $0x2b0] sm:$0xf]
    %v885 = vld [vmem:[#allocation3 + $0x2b4] sm:$0xf]
    %v886 = vld [vmem:[#allocation3 + $0x2b8] sm:$0xf]
    %v887 = vld [vmem:[#allocation3 + $0x2bc] sm:$0xf]
    %v888 = vld [vmem:[#allocation3 + $0x2c0] sm:$0xf]
    %v889 = vld [vmem:[#allocation3 + $0x2c4] sm:$0xf]
    %v890 = vld [vmem:[#allocation3 + $0x2c8] sm:$0xf]
    %v891 = vld [vmem:[#allocation3 + $0x2cc] sm:$0xf]
    %v892 = vld [vmem:[#allocation3 + $0x2d0] sm:$0xf]
    %v893 = vld [vmem:[#allocation3 + $0x2d4] sm:$0xf]
    %v894 = vld [vmem:[#allocation3 + $0x2d8] sm:$0xf]
    %v895 = vld [vmem:[#allocation3 + $0x2dc] sm:$0xf]
    %v896 = vld [vmem:[#allocation3 + $0x2e0] sm:$0xf]
    %v897 = vld [vmem:[#allocation3 + $0x2e4] sm:$0xf]
    %v898 = vld [vmem:[#allocation3 + $0x2e8] sm:$0xf]
    %v899 = vld [vmem:[#allocation3 + $0x2ec] sm:$0xf]
    %v900 = vld [vmem:[#allocation3 + $0x2f0] sm:$0xf]
    %v901 = vld [vmem:[#allocation3 + $0x2f4] sm:$0xf]
    %v902 = vld [vmem:[#allocation3 + $0x2f8] sm:$0xf]
    %v903 = vld [vmem:[#allocation3 + $0x2fc] sm:$0xf]
    %v904 = vld [vmem:[#allocation3 + $0x300] sm:$0xf]
    %v905 = vld [vmem:[#allocation3 + $0x304] sm:$0xf]
    %v906 = vld [vmem:[#allocation3 + $0x308] sm:$0xf]
    %v907 = vld [vmem:[#allocation3 + $0x30c] sm:$0xf]
    %v908 = vld [vmem:[#allocation3 + $0x310] sm:$0xf]
    %v909 = vld [vmem:[#allocation3 + $0x314] sm:$0xf]
    %v910 = vld [vmem:[#allocation3 + $0x318] sm:$0xf]
    %v911 = vld [vmem:[#allocation3 + $0x31c] sm:$0xf]
    %v912 = vld [vmem:[#allocation3 + $0x320] sm:$0xf]
    %v913 = vld [vmem:[#allocation3 + $0x324] sm:$0xf]
    %v914 = vld [vmem:[#allocation3 + $0x328] sm:$0xf]
    %v915 = vld [vmem:[#allocation3 + $0x32c] sm:$0xf]
    %v916 = vld [vmem:[#allocation3 + $0x330] sm:$0xf]
    %v917 = vld [vmem:[#allocation3 + $0x334] sm:$0xf]
    %v918 = vld [vmem:[#allocation3 + $0x338] sm:$0xf]
    %v919 = vld [vmem:[#allocation3 + $0x33c] sm:$0xf]
    %v920 = vld [vmem:[#allocation3 + $0x340] sm:$0xf]
    %v921 = vld [vmem:[#allocation3 + $0x344] sm:$0xf]
    %v922 = vld [vmem:[#allocation3 + $0x348] sm:$0xf]
    %v923 = vld [vmem:[#allocation3 + $0x34c] sm:$0xf]
    %v924 = vld [vmem:[#allocation3 + $0x350] sm:$0xf]
    %v925 = vld [vmem:[#allocation3 + $0x354] sm:$0xf]
    %v926 = vld [vmem:[#allocation3 + $0x358] sm:$0xf]
    %v927 = vld [vmem:[#allocation3 + $0x35c] sm:$0xf]
    %v928 = vld [vmem:[#allocation3 + $0x360] sm:$0xf]
    %v929 = vld [vmem:[#allocation3 + $0x364] sm:$0xf]
    %v930 = vld [vmem:[#allocation3 + $0x368] sm:$0xf]
    %v931 = vld [vmem:[#allocation3 + $0x36c] sm:$0xf]
    %v932 = vld [vmem:[#allocation3 + $0x370] sm:$0xf]
    %v933 = vld [vmem:[#allocation3 + $0x374] sm:$0xf]
    %v934 = vld [vmem:[#allocation3 + $0x378] sm:$0xf]
    %v935 = vld [vmem:[#allocation3 + $0x37c] sm:$0xf]
    %v936 = vld [vmem:[#allocation3 + $0x380] sm:$0xf]
    %v937 = vld [vmem:[#allocation3 + $0x384] sm:$0xf]
    %v938 = vld [vmem:[#allocation3 + $0x388] sm:$0xf]
    %v939 = vld [vmem:[#allocation3 + $0x38c] sm:$0xf]
    %v940 = vld [vmem:[#allocation3 + $0x390] sm:$0xf]
    %v941 = vld [vmem:[#allocation3 + $0x394] sm:$0xf]
    %v942 = vld [vmem:[#allocation3 + $0x398] sm:$0xf]
    %v943 = vld [vmem:[#allocation3 + $0x39c] sm:$0xf]
    %v944 = vld [vmem:[#allocation3 + $0x3a0] sm:$0xf]
    %v945 = vld [vmem:[#allocation3 + $0x3a4] sm:$0xf]
    %v946 = vld [vmem:[#allocation3 + $0x3a8] sm:$0xf]
    %v947 = vld [vmem:[#allocation3 + $0x3ac] sm:$0xf]
    %v948 = vld [vmem:[#allocation3 + $0x3b0] sm:$0xf]
    %v949 = vld [vmem:[#allocation3 + $0x3b4] sm:$0xf]
    %v950 = vld [vmem:[#allocation3 + $0x3b8] sm:$0xf]
    %v951 = vld [vmem:[#allocation3 + $0x3bc] sm:$0xf]
    %v952 = vld [vmem:[#allocation3 + $0x3c0] sm:$0xf]
    %v953 = vld [vmem:[#allocation3 + $0x3c4] sm:$0xf]
    %v954 = vld [vmem:[#allocation3 + $0x3c8] sm:$0xf]
    %v955 = vld [vmem:[#allocation3 + $0x3cc] sm:$0xf]
    %v956 = vld [vmem:[#allocation3 + $0x3d0] sm:$0xf]
    %v957 = vld [vmem:[#allocation3 + $0x3d4] sm:$0xf]
    %v958 = vld [vmem:[#allocation3 + $0x3d8] sm:$0xf]
    %v959 = vld [vmem:[#allocation3 + $0x3dc] sm:$0xf]
    %v960 = vld [vmem:[#allocation3 + $0x3e0] sm:$0xf]
    %v961 = vld [vmem:[#allocation3 + $0x3e4] sm:$0xf]
    %v962 = vld [vmem:[#allocation3 + $0x3e8] sm:$0xf]
    %v963 = vld [vmem:[#allocation3 + $0x3ec] sm:$0xf]
    %v964 = vld [vmem:[#allocation3 + $0x3f0] sm:$0xf]
    %v965 = vld [vmem:[#allocation3 + $0x3f4] sm:$0xf]
    %v966 = vld [vmem:[#allocation3 + $0x3f8] sm:$0xf]
    %v967 = vld [vmem:[#allocation3 + $0x3fc] sm:$0xf]
    %v1224 = vunpack.c.l.b16 %v712
    %v1225 = vunpack.c.l.b16 %v713
    %v1226 = vunpack.c.l.b16 %v714
    %v1227 = vunpack.c.l.b16 %v715
    %v1228 = vunpack.c.l.b16 %v716
    %v1229 = vunpack.c.l.b16 %v717
    %v1230 = vunpack.c.l.b16 %v718
    %v1231 = vunpack.c.l.b16 %v719
    %v1232 = vunpack.c.l.b16 %v720
    %v1233 = vunpack.c.l.b16 %v721
    %v1234 = vunpack.c.l.b16 %v722
    %v1235 = vunpack.c.l.b16 %v723
    %v1236 = vunpack.c.l.b16 %v724
    %v1237 = vunpack.c.l.b16 %v725
    %v1238 = vunpack.c.l.b16 %v726
    %v1239 = vunpack.c.l.b16 %v727
    %v1240 = vunpack.c.l.b16 %v728
    %v1241 = vunpack.c.l.b16 %v729
    %v1242 = vunpack.c.l.b16 %v730
    %v1243 = vunpack.c.l.b16 %v731
    %v1244 = vunpack.c.l.b16 %v732
    %v1245 = vunpack.c.l.b16 %v733
    %v1246 = vunpack.c.l.b16 %v734
    %v1247 = vunpack.c.l.b16 %v735
    %v1248 = vunpack.c.l.b16 %v736
    %v1249 = vunpack.c.l.b16 %v737
    %v1250 = vunpack.c.l.b16 %v738
    %v1251 = vunpack.c.l.b16 %v739
    %v1252 = vunpack.c.l.b16 %v740
    %v1253 = vunpack.c.l.b16 %v741
    %v1254 = vunpack.c.l.b16 %v742
    %v1255 = vunpack.c.l.b16 %v743
    %v1256 = vunpack.c.l.b16 %v744
    %v1257 = vunpack.c.l.b16 %v745
    %v1258 = vunpack.c.l.b16 %v746
    %v1259 = vunpack.c.l.b16 %v747
    %v1260 = vunpack.c.l.b16 %v748
    %v1261 = vunpack.c.l.b16 %v749
    %v1262 = vunpack.c.l.b16 %v750
    %v1263 = vunpack.c.l.b16 %v751
    %v1264 = vunpack.c.l.b16 %v752
    %v1265 = vunpack.c.l.b16 %v753
    %v1266 = vunpack.c.l.b16 %v754
    %v1267 = vunpack.c.l.b16 %v755
    %v1268 = vunpack.c.l.b16 %v756
    %v1269 = vunpack.c.l.b16 %v757
    %v1270 = vunpack.c.l.b16 %v758
    %v1271 = vunpack.c.l.b16 %v759
    %v1272 = vunpack.c.l.b16 %v760
    %v1273 = vunpack.c.l.b16 %v761
    %v1274 = vunpack.c.l.b16 %v762
    %v1275 = vunpack.c.l.b16 %v763
    %v1276 = vunpack.c.l.b16 %v764
    %v1277 = vunpack.c.l.b16 %v765
    %v1278 = vunpack.c.l.b16 %v766
    %v1279 = vunpack.c.l.b16 %v767
    %v1280 = vunpack.c.l.b16 %v768
    %v1281 = vunpack.c.l.b16 %v769
    %v1282 = vunpack.c.l.b16 %v770
    %v1283 = vunpack.c.l.b16 %v771
    %v1284 = vunpack.c.l.b16 %v772
    %v1285 = vunpack.c.l.b16 %v773
    %v1286 = vunpack.c.l.b16 %v774
    %v1287 = vunpack.c.l.b16 %v775
    %v1288 = vunpack.c.l.b16 %v776
    %v1289 = vunpack.c.l.b16 %v777
    %v1290 = vunpack.c.l.b16 %v778
    %v1291 = vunpack.c.l.b16 %v779
    %v1292 = vunpack.c.l.b16 %v780
    %v1293 = vunpack.c.l.b16 %v781
    %v1294 = vunpack.c.l.b16 %v782
    %v1295 = vunpack.c.l.b16 %v783
    %v1296 = vunpack.c.l.b16 %v784
    %v1297 = vunpack.c.l.b16 %v785
    %v1298 = vunpack.c.l.b16 %v786
    %v1299 = vunpack.c.l.b16 %v787
    %v1300 = vunpack.c.l.b16 %v788
    %v1301 = vunpack.c.l.b16 %v789
    %v1302 = vunpack.c.l.b16 %v790
    %v1303 = vunpack.c.l.b16 %v791
    %v1304 = vunpack.c.l.b16 %v792
    %v1305 = vunpack.c.l.b16 %v793
    %v1306 = vunpack.c.l.b16 %v794
    %v1307 = vunpack.c.l.b16 %v795
    %v1308 = vunpack.c.l.b16 %v796
    %v1309 = vunpack.c.l.b16 %v797
    %v1310 = vunpack.c.l.b16 %v798
    %v1311 = vunpack.c.l.b16 %v799
    %v1312 = vunpack.c.l.b16 %v800
    %v1313 = vunpack.c.l.b16 %v801
    %v1314 = vunpack.c.l.b16 %v802
    %v1315 = vunpack.c.l.b16 %v803
    %v1316 = vunpack.c.l.b16 %v804
    %v1317 = vunpack.c.l.b16 %v805
    %v1318 = vunpack.c.l.b16 %v806
    %v1319 = vunpack.c.l.b16 %v807
    %v1320 = vunpack.c.l.b16 %v808
    %v1321 = vunpack.c.l.b16 %v809
    %v1322 = vunpack.c.l.b16 %v810
    %v1323 = vunpack.c.l.b16 %v811
    %v1324 = vunpack.c.l.b16 %v812
    %v1325 = vunpack.c.l.b16 %v813
    %v1326 = vunpack.c.l.b16 %v814
    %v1327 = vunpack.c.l.b16 %v815
    %v1328 = vunpack.c.l.b16 %v816
    %v1329 = vunpack.c.l.b16 %v817
    %v1330 = vunpack.c.l.b16 %v818
    %v1331 = vunpack.c.l.b16 %v819
    %v1332 = vunpack.c.l.b16 %v820
    %v1333 = vunpack.c.l.b16 %v821
    %v1334 = vunpack.c.l.b16 %v822
    %v1335 = vunpack.c.l.b16 %v823
    %v1336 = vunpack.c.l.b16 %v824
    %v1337 = vunpack.c.l.b16 %v825
    %v1338 = vunpack.c.l.b16 %v826
    %v1339 = vunpack.c.l.b16 %v827
    %v1340 = vunpack.c.l.b16 %v828
    %v1341 = vunpack.c.l.b16 %v829
    %v1342 = vunpack.c.l.b16 %v830
    %v1343 = vunpack.c.l.b16 %v831
    %v1344 = vunpack.c.l.b16 %v832
    %v1345 = vunpack.c.l.b16 %v833
    %v1346 = vunpack.c.l.b16 %v834
    %v1347 = vunpack.c.l.b16 %v835
    %v1348 = vunpack.c.l.b16 %v836
    %v1349 = vunpack.c.l.b16 %v837
    %v1350 = vunpack.c.l.b16 %v838
    %v1351 = vunpack.c.l.b16 %v839
    %v1352 = vunpack.c.l.b16 %v840
    %v1353 = vunpack.c.l.b16 %v841
    %v1354 = vunpack.c.l.b16 %v842
    %v1355 = vunpack.c.l.b16 %v843
    %v1356 = vunpack.c.l.b16 %v844
    %v1357 = vunpack.c.l.b16 %v845
    %v1358 = vunpack.c.l.b16 %v846
    %v1359 = vunpack.c.l.b16 %v847
    %v1360 = vunpack.c.l.b16 %v848
    %v1361 = vunpack.c.l.b16 %v849
    %v1362 = vunpack.c.l.b16 %v850
    %v1363 = vunpack.c.l.b16 %v851
    %v1364 = vunpack.c.l.b16 %v852
    %v1365 = vunpack.c.l.b16 %v853
    %v1366 = vunpack.c.l.b16 %v854
    %v1367 = vunpack.c.l.b16 %v855
    %v1368 = vunpack.c.l.b16 %v856
    %v1369 = vunpack.c.l.b16 %v857
    %v1370 = vunpack.c.l.b16 %v858
    %v1371 = vunpack.c.l.b16 %v859
    %v1372 = vunpack.c.l.b16 %v860
    %v1373 = vunpack.c.l.b16 %v861
    %v1374 = vunpack.c.l.b16 %v862
    %v1375 = vunpack.c.l.b16 %v863
    %v1376 = vunpack.c.l.b16 %v864
    %v1377 = vunpack.c.l.b16 %v865
    %v1378 = vunpack.c.l.b16 %v866
    %v1379 = vunpack.c.l.b16 %v867
    %v1380 = vunpack.c.l.b16 %v868
    %v1381 = vunpack.c.l.b16 %v869
    %v1382 = vunpack.c.l.b16 %v870
    %v1383 = vunpack.c.l.b16 %v871
    %v1384 = vunpack.c.l.b16 %v872
    %v1385 = vunpack.c.l.b16 %v873
    %v1386 = vunpack.c.l.b16 %v874
    %v1387 = vunpack.c.l.b16 %v875
    %v1388 = vunpack.c.l.b16 %v876
    %v1389 = vunpack.c.l.b16 %v877
    %v1390 = vunpack.c.l.b16 %v878
    %v1391 = vunpack.c.l.b16 %v879
    %v1392 = vunpack.c.l.b16 %v880
    %v1393 = vunpack.c.l.b16 %v881
    %v1394 = vunpack.c.l.b16 %v882
    %v1395 = vunpack.c.l.b16 %v883
    %v1396 = vunpack.c.l.b16 %v884
    %v1397 = vunpack.c.l.b16 %v885
    %v1398 = vunpack.c.l.b16 %v886
    %v1399 = vunpack.c.l.b16 %v887
    %v1400 = vunpack.c.l.b16 %v888
    %v1401 = vunpack.c.l.b16 %v889
    %v1402 = vunpack.c.l.b16 %v890
    %v1403 = vunpack.c.l.b16 %v891
    %v1404 = vunpack.c.l.b16 %v892
    %v1405 = vunpack.c.l.b16 %v893
    %v1406 = vunpack.c.l.b16 %v894
    %v1407 = vunpack.c.l.b16 %v895
    %v1408 = vunpack.c.l.b16 %v896
    %v1409 = vunpack.c.l.b16 %v897
    %v1410 = vunpack.c.l.b16 %v898
    %v1411 = vunpack.c.l.b16 %v899
    %v1412 = vunpack.c.l.b16 %v900
    %v1413 = vunpack.c.l.b16 %v901
    %v1414 = vunpack.c.l.b16 %v902
    %v1415 = vunpack.c.l.b16 %v903
    %v1416 = vunpack.c.l.b16 %v904
    %v1417 = vunpack.c.l.b16 %v905
    %v1418 = vunpack.c.l.b16 %v906
    %v1419 = vunpack.c.l.b16 %v907
    %v1420 = vunpack.c.l.b16 %v908
    %v1421 = vunpack.c.l.b16 %v909
    %v1422 = vunpack.c.l.b16 %v910
    %v1423 = vunpack.c.l.b16 %v911
    %v1424 = vunpack.c.l.b16 %v912
    %v1425 = vunpack.c.l.b16 %v913
    %v1426 = vunpack.c.l.b16 %v914
    %v1427 = vunpack.c.l.b16 %v915
    %v1428 = vunpack.c.l.b16 %v916
    %v1429 = vunpack.c.l.b16 %v917
    %v1430 = vunpack.c.l.b16 %v918
    %v1431 = vunpack.c.l.b16 %v919
    %v1432 = vunpack.c.l.b16 %v920
    %v1433 = vunpack.c.l.b16 %v921
    %v1434 = vunpack.c.l.b16 %v922
    %v1435 = vunpack.c.l.b16 %v923
    %v1436 = vunpack.c.l.b16 %v924
    %v1437 = vunpack.c.l.b16 %v925
    %v1438 = vunpack.c.l.b16 %v926
    %v1439 = vunpack.c.l.b16 %v927
    %v1440 = vunpack.c.l.b16 %v928
    %v1441 = vunpack.c.l.b16 %v929
    %v1442 = vunpack.c.l.b16 %v930
    %v1443 = vunpack.c.l.b16 %v931
    %v1444 = vunpack.c.l.b16 %v932
    %v1445 = vunpack.c.l.b16 %v933
    %v1446 = vunpack.c.l.b16 %v934
    %v1447 = vunpack.c.l.b16 %v935
    %v1448 = vunpack.c.l.b16 %v936
    %v1449 = vunpack.c.l.b16 %v937
    %v1450 = vunpack.c.l.b16 %v938
    %v1451 = vunpack.c.l.b16 %v939
    %v1452 = vunpack.c.l.b16 %v940
    %v1453 = vunpack.c.l.b16 %v941
    %v1454 = vunpack.c.l.b16 %v942
    %v1455 = vunpack.c.l.b16 %v943
    %v1456 = vunpack.c.l.b16 %v944
    %v1457 = vunpack.c.l.b16 %v945
    %v1458 = vunpack.c.l.b16 %v946
    %v1459 = vunpack.c.l.b16 %v947
    %v1460 = vunpack.c.l.b16 %v948
    %v1461 = vunpack.c.l.b16 %v949
    %v1462 = vunpack.c.l.b16 %v950
    %v1463 = vunpack.c.l.b16 %v951
    %v1464 = vunpack.c.l.b16 %v952
    %v1465 = vunpack.c.l.b16 %v953
    %v1466 = vunpack.c.l.b16 %v954
    %v1467 = vunpack.c.l.b16 %v955
    %v1468 = vunpack.c.l.b16 %v956
    %v1469 = vunpack.c.l.b16 %v957
    %v1470 = vunpack.c.l.b16 %v958
    %v1471 = vunpack.c.l.b16 %v959
    %v1472 = vunpack.c.l.b16 %v960
    %v1473 = vunpack.c.l.b16 %v961
    %v1474 = vunpack.c.l.b16 %v962
    %v1475 = vunpack.c.l.b16 %v963
    %v1476 = vunpack.c.l.b16 %v964
    %v1477 = vunpack.c.l.b16 %v965
    %v1478 = vunpack.c.l.b16 %v966
    %v1479 = vunpack.c.l.b16 %v967
    %v1480 = vpack.c.b16 %v1225, %v1224
    %v1481 = vpack.c.b16 %v1227, %v1226
    %v1482 = vpack.c.b16 %v1229, %v1228
    %v1483 = vpack.c.b16 %v1231, %v1230
    %v1484 = vpack.c.b16 %v1233, %v1232
    %v1485 = vpack.c.b16 %v1235, %v1234
    %v1486 = vpack.c.b16 %v1237, %v1236
    %v1487 = vpack.c.b16 %v1239, %v1238
    %v1488 = vpack.c.b16 %v1241, %v1240
    %v1489 = vpack.c.b16 %v1243, %v1242
    %v1490 = vpack.c.b16 %v1245, %v1244
    %v1491 = vpack.c.b16 %v1247, %v1246
    %v1492 = vpack.c.b16 %v1249, %v1248
    %v1493 = vpack.c.b16 %v1251, %v1250
    %v1494 = vpack.c.b16 %v1253, %v1252
    %v1495 = vpack.c.b16 %v1255, %v1254
    %v1496 = vpack.c.b16 %v1257, %v1256
    %v1497 = vpack.c.b16 %v1259, %v1258
    %v1498 = vpack.c.b16 %v1261, %v1260
    %v1499 = vpack.c.b16 %v1263, %v1262
    %v1500 = vpack.c.b16 %v1265, %v1264
    %v1501 = vpack.c.b16 %v1267, %v1266
    %v1502 = vpack.c.b16 %v1269, %v1268
    %v1503 = vpack.c.b16 %v1271, %v1270
    %v1504 = vpack.c.b16 %v1273, %v1272
    %v1505 = vpack.c.b16 %v1275, %v1274
    %v1506 = vpack.c.b16 %v1277, %v1276
    %v1507 = vpack.c.b16 %v1279, %v1278
    %v1508 = vpack.c.b16 %v1281, %v1280
    %v1509 = vpack.c.b16 %v1283, %v1282
    %v1510 = vpack.c.b16 %v1285, %v1284
    %v1511 = vpack.c.b16 %v1287, %v1286
    %v1512 = vpack.c.b16 %v1289, %v1288
    %v1513 = vpack.c.b16 %v1291, %v1290
    %v1514 = vpack.c.b16 %v1293, %v1292
    %v1515 = vpack.c.b16 %v1295, %v1294
    %v1516 = vpack.c.b16 %v1297, %v1296
    %v1517 = vpack.c.b16 %v1299, %v1298
    %v1518 = vpack.c.b16 %v1301, %v1300
    %v1519 = vpack.c.b16 %v1303, %v1302
    %v1520 = vpack.c.b16 %v1305, %v1304
    %v1521 = vpack.c.b16 %v1307, %v1306
    %v1522 = vpack.c.b16 %v1309, %v1308
    %v1523 = vpack.c.b16 %v1311, %v1310
    %v1524 = vpack.c.b16 %v1313, %v1312
    %v1525 = vpack.c.b16 %v1315, %v1314
    %v1526 = vpack.c.b16 %v1317, %v1316
    %v1527 = vpack.c.b16 %v1319, %v1318
    %v1528 = vpack.c.b16 %v1321, %v1320
    %v1529 = vpack.c.b16 %v1323, %v1322
    %v1530 = vpack.c.b16 %v1325, %v1324
    %v1531 = vpack.c.b16 %v1327, %v1326
    %v1532 = vpack.c.b16 %v1329, %v1328
    %v1533 = vpack.c.b16 %v1331, %v1330
    %v1534 = vpack.c.b16 %v1333, %v1332
    %v1535 = vpack.c.b16 %v1335, %v1334
    %v1536 = vpack.c.b16 %v1337, %v1336
    %v1537 = vpack.c.b16 %v1339, %v1338
    %v1538 = vpack.c.b16 %v1341, %v1340
    %v1539 = vpack.c.b16 %v1343, %v1342
    %v1540 = vpack.c.b16 %v1345, %v1344
    %v1541 = vpack.c.b16 %v1347, %v1346
    %v1542 = vpack.c.b16 %v1349, %v1348
    %v1543 = vpack.c.b16 %v1351, %v1350
    %v1544 = vpack.c.b16 %v1353, %v1352
    %v1545 = vpack.c.b16 %v1355, %v1354
    %v1546 = vpack.c.b16 %v1357, %v1356
    %v1547 = vpack.c.b16 %v1359, %v1358
    %v1548 = vpack.c.b16 %v1361, %v1360
    %v1549 = vpack.c.b16 %v1363, %v1362
    %v1550 = vpack.c.b16 %v1365, %v1364
    %v1551 = vpack.c.b16 %v1367, %v1366
    %v1552 = vpack.c.b16 %v1369, %v1368
    %v1553 = vpack.c.b16 %v1371, %v1370
    %v1554 = vpack.c.b16 %v1373, %v1372
    %v1555 = vpack.c.b16 %v1375, %v1374
    %v1556 = vpack.c.b16 %v1377, %v1376
    %v1557 = vpack.c.b16 %v1379, %v1378
    %v1558 = vpack.c.b16 %v1381, %v1380
    %v1559 = vpack.c.b16 %v1383, %v1382
    %v1560 = vpack.c.b16 %v1385, %v1384
    %v1561 = vpack.c.b16 %v1387, %v1386
    %v1562 = vpack.c.b16 %v1389, %v1388
    %v1563 = vpack.c.b16 %v1391, %v1390
    %v1564 = vpack.c.b16 %v1393, %v1392
    %v1565 = vpack.c.b16 %v1395, %v1394
    %v1566 = vpack.c.b16 %v1397, %v1396
    %v1567 = vpack.c.b16 %v1399, %v1398
    %v1568 = vpack.c.b16 %v1401, %v1400
    %v1569 = vpack.c.b16 %v1403, %v1402
    %v1570 = vpack.c.b16 %v1405, %v1404
    %v1571 = vpack.c.b16 %v1407, %v1406
    %v1572 = vpack.c.b16 %v1409, %v1408
    %v1573 = vpack.c.b16 %v1411, %v1410
    %v1574 = vpack.c.b16 %v1413, %v1412
    %v1575 = vpack.c.b16 %v1415, %v1414
    %v1576 = vpack.c.b16 %v1417, %v1416
    %v1577 = vpack.c.b16 %v1419, %v1418
    %v1578 = vpack.c.b16 %v1421, %v1420
    %v1579 = vpack.c.b16 %v1423, %v1422
    %v1580 = vpack.c.b16 %v1425, %v1424
    %v1581 = vpack.c.b16 %v1427, %v1426
    %v1582 = vpack.c.b16 %v1429, %v1428
    %v1583 = vpack.c.b16 %v1431, %v1430
    %v1584 = vpack.c.b16 %v1433, %v1432
    %v1585 = vpack.c.b16 %v1435, %v1434
    %v1586 = vpack.c.b16 %v1437, %v1436
    %v1587 = vpack.c.b16 %v1439, %v1438
    %v1588 = vpack.c.b16 %v1441, %v1440
    %v1589 = vpack.c.b16 %v1443, %v1442
    %v1590 = vpack.c.b16 %v1445, %v1444
    %v1591 = vpack.c.b16 %v1447, %v1446
    %v1592 = vpack.c.b16 %v1449, %v1448
    %v1593 = vpack.c.b16 %v1451, %v1450
    %v1594 = vpack.c.b16 %v1453, %v1452
    %v1595 = vpack.c.b16 %v1455, %v1454
    %v1596 = vpack.c.b16 %v1457, %v1456
    %v1597 = vpack.c.b16 %v1459, %v1458
    %v1598 = vpack.c.b16 %v1461, %v1460
    %v1599 = vpack.c.b16 %v1463, %v1462
    %v1600 = vpack.c.b16 %v1465, %v1464
    %v1601 = vpack.c.b16 %v1467, %v1466
    %v1602 = vpack.c.b16 %v1469, %v1468
    %v1603 = vpack.c.b16 %v1471, %v1470
    %v1604 = vpack.c.b16 %v1473, %v1472
    %v1605 = vpack.c.b16 %v1475, %v1474
    %v1606 = vpack.c.b16 %v1477, %v1476
    %v1607 = vpack.c.b16 %v1479, %v1478
    %1736 = vmatprep.subr.bf16.mxu0 0
    %1737 = vmatpush1.bf16.msra.mxu0 %v1480
    %1738 = vmatprep.subr.bf16.mxu0 0
    %1739 = vmatpush1.bf16.msra.mxu0 %v1481
    %1740 = vmatprep.subr.bf16.mxu0 0
    %1741 = vmatpush1.bf16.msra.mxu0 %v1482
    %1742 = vmatprep.subr.bf16.mxu0 0
    %1743 = vmatpush1.bf16.msra.mxu0 %v1483
    %1744 = vmatprep.subr.bf16.mxu0 0
    %1745 = vmatpush1.bf16.msra.mxu0 %v1484
    %1746 = vmatprep.subr.bf16.mxu0 0
    %1747 = vmatpush1.bf16.msra.mxu0 %v1485
    %1748 = vmatprep.subr.bf16.mxu0 0
    %1749 = vmatpush1.bf16.msra.mxu0 %v1486
    %1750 = vmatprep.subr.bf16.mxu0 0
    %1751 = vmatpush1.bf16.msra.mxu0 %v1487
    %1752 = vmatprep.subr.bf16.mxu0 0
    %1753 = vmatpush1.bf16.msra.mxu0 %v1488
    %1754 = vmatprep.subr.bf16.mxu0 0
    %1755 = vmatpush1.bf16.msra.mxu0 %v1489
    %1756 = vmatprep.subr.bf16.mxu0 0
    %1757 = vmatpush1.bf16.msra.mxu0 %v1490
    %1758 = vmatprep.subr.bf16.mxu0 0
    %1759 = vmatpush1.bf16.msra.mxu0 %v1491
    %1760 = vmatprep.subr.bf16.mxu0 0
    %1761 = vmatpush1.bf16.msra.mxu0 %v1492
    %1762 = vmatprep.subr.bf16.mxu0 0
    %1763 = vmatpush1.bf16.msra.mxu0 %v1493
    %1764 = vmatprep.subr.bf16.mxu0 0
    %1765 = vmatpush1.bf16.msra.mxu0 %v1494
    %1766 = vmatprep.subr.bf16.mxu0 0
    %1767 = vmatpush1.bf16.msra.mxu0 %v1495
    %1768 = vmatprep.mubr.bf16.mxu0 %v649
    %1769 = vmatmul.mubr.bf16.gmra.mrb[0].mxu0 %v648
    %v1770 = vpop.f32.mrb[0].mxu0
    %v1771 = vadd.f32 0.0, %v1770
    %v1772 = vpop.f32.mrb[0].mxu0
    %v1773 = vpop.f32.mrb[0].mxu0
    %v1774 = vadd.f32 0.0, %v1773
    %v1775 = vpop.f32.mrb[0].mxu0
    %1776 = vmatprep.mubr.bf16.mxu0 %v665
    %1777 = vmatmul.mubr.bf16.gmra.mrb[0].mxu0 %v664
    %v1778 = vpop.f32.mrb[0].mxu0
    %v1779 = vadd.f32 0.0, %v1778
    %v1780 = vpop.f32.mrb[0].mxu0
    %v1781 = vpop.f32.mrb[0].mxu0
    %v1782 = vadd.f32 0.0, %v1781
    %v1783 = vpop.f32.mrb[0].mxu0
    %1784 = vmatprep.mubr.bf16.mxu0 %v681
    %1785 = vmatmul.mubr.bf16.gmra.mrb[0].mxu0 %v680
    %v1786 = vpop.f32.mrb[0].mxu0
    %v1787 = vadd.f32 0.0, %v1786
    %v1788 = vpop.f32.mrb[0].mxu0
    %v1789 = vpop.f32.mrb[0].mxu0
    %v1790 = vadd.f32 0.0, %v1789
    %v1791 = vpop.f32.mrb[0].mxu0
    %1792 = vmatprep.mubr.bf16.mxu0 %v697
    %1793 = vmatmul.mubr.bf16.gmra.mrb[0].mxu0 %v696
    %v1794 = vpop.f32.mrb[0].mxu0
    %v1795 = vadd.f32 0.0, %v1794
    %v1796 = vpop.f32.mrb[0].mxu0
    %v1797 = vpop.f32.mrb[0].mxu0
    %v1798 = vadd.f32 0.0, %v1797
    %v1799 = vpop.f32.mrb[0].mxu0
    %1800 = vdwg.mxu0
    %1801 = vmatprep.subr.bf16.mxu0 0
    %1802 = vmatpush1.bf16.msra.mxu0 %v1496
    %1803 = vmatprep.subr.bf16.mxu0 0
    %1804 = vmatpush1.bf16.msra.mxu0 %v1497
    %1805 = vmatprep.subr.bf16.mxu0 0
    %1806 = vmatpush1.bf16.msra.mxu0 %v1498
    %1807 = vmatprep.subr.bf16.mxu0 0
    %1808 = vmatpush1.bf16.msra.mxu0 %v1499
    %1809 = vmatprep.subr.bf16.mxu0 0
    %1810 = vmatpush1.bf16.msra.mxu0 %v1500
    %1811 = vmatprep.subr.bf16.mxu0 0
    %1812 = vmatpush1.bf16.msra.mxu0 %v1501
    %1813 = vmatprep.subr.bf16.mxu0 0
    %1814 = vmatpush1.bf16.msra.mxu0 %v1502
    %1815 = vmatprep.subr.bf16.mxu0 0
    %1816 = vmatpush1.bf16.msra.mxu0 %v1503
    %1817 = vmatprep.subr.bf16.mxu0 0
    %1818 = vmatpush1.bf16.msra.mxu0 %v1504
    %1819 = vmatprep.subr.bf16.mxu0 0
    %1820 = vmatpush1.bf16.msra.mxu0 %v1505
    %1821 = vmatprep.subr.bf16.mxu0 0
    %1822 = vmatpush1.bf16.msra.mxu0 %v1506
    %1823 = vmatprep.subr.bf16.mxu0 0
    %1824 = vmatpush1.bf16.msra.mxu0 %v1507
    %1825 = vmatprep.subr.bf16.mxu0 0
    %1826 = vmatpush1.bf16.msra.mxu0 %v1508
    %1827 = vmatprep.subr.bf16.mxu0 0
    %1828 = vmatpush1.bf16.msra.mxu0 %v1509
    %1829 = vmatprep.subr.bf16.mxu0 0
    %1830 = vmatpush1.bf16.msra.mxu0 %v1510
    %1831 = vmatprep.subr.bf16.mxu0 0
    %1832 = vmatpush1.bf16.msra.mxu0 %v1511
    %1833 = vmatprep.mubr.bf16.mxu0 %v651
    %1834 = vmatmul.mubr.bf16.gmra.mrb[0].mxu0 %v650
    %v1835 = vpop.f32.mrb[0].mxu0
    %v1836 = vadd.f32 %v1771, %v1835
    %v1837 = vpop.f32.mrb[0].mxu0
    %v1838 = vpop.f32.mrb[0].mxu0
    %v1839 = vadd.f32 %v1774, %v1838
    %v1840 = vpop.f32.mrb[0].mxu0
    %1841 = vmatprep.mubr.bf16.mxu0 %v667
    %1842 = vmatmul.mubr.bf16.gmra.mrb[0].mxu0 %v666
    %v1843 = vpop.f32.mrb[0].mxu0
    %v1844 = vadd.f32 %v1779, %v1843
    %v1845 = vpop.f32.mrb[0].mxu0
    %v1846 = vpop.f32.mrb[0].mxu0
    %v1847 = vadd.f32 %v1782, %v1846
    %v1848 = vpop.f32.mrb[0].mxu0
    %1849 = vmatprep.mubr.bf16.mxu0 %v683
    %1850 = vmatmul.mubr.bf16.gmra.mrb[0].mxu0 %v682
    %v1851 = vpop.f32.mrb[0].mxu0
    %v1852 = vadd.f32 %v1787, %v1851
    %v1853 = vpop.f32.mrb[0].mxu0
    %v1854 = vpop.f32.mrb[0].mxu0
    %v1855 = vadd.f32 %v1790, %v1854
    %v1856 = vpop.f32.mrb[0].mxu0
    %1857 = vmatprep.mubr.bf16.mxu0 %v699
    %1858 = vmatmul.mubr.bf16.gmra.mrb[0].mxu0 %v698
    %v1859 = vpop.f32.mrb[0].mxu0
    %v1860 = vadd.f32 %v1795, %v1859
    %v1861 = vpop.f32.mrb[0].mxu0
    %v1862 = vpop.f32.mrb[0].mxu0
    %v1863 = vadd.f32 %v1798, %v1862
    %v1864 = vpop.f32.mrb[0].mxu0
    %1865 = vdwg.mxu0
    %1866 = vmatprep.subr.bf16.mxu0 0
    %1867 = vmatpush1.bf16.msra.mxu0 %v1512
    %1868 = vmatprep.subr.bf16.mxu0 0
    %1869 = vmatpush1.bf16.msra.mxu0 %v1513
    %1870 = vmatprep.subr.bf16.mxu0 0
    %1871 = vmatpush1.bf16.msra.mxu0 %v1514
    %1872 = vmatprep.subr.bf16.mxu0 0
    %1873 = vmatpush1.bf16.msra.mxu0 %v1515
    %1874 = vmatprep.subr.bf16.mxu0 0
    %1875 = vmatpush1.bf16.msra.mxu0 %v1516
    %1876 = vmatprep.subr.bf16.mxu0 0
    %1877 = vmatpush1.bf16.msra.mxu0 %v1517
    %1878 = vmatprep.subr.bf16.mxu0 0
    %1879 = vmatpush1.bf16.msra.mxu0 %v1518
    %1880 = vmatprep.subr.bf16.mxu0 0
    %1881 = vmatpush1.bf16.msra.mxu0 %v1519
    %1882 = vmatprep.subr.bf16.mxu0 0
    %1883 = vmatpush1.bf16.msra.mxu0 %v1520
    %1884 = vmatprep.subr.bf16.mxu0 0
    %1885 = vmatpush1.bf16.msra.mxu0 %v1521
    %1886 = vmatprep.subr.bf16.mxu0 0
    %1887 = vmatpush1.bf16.msra.mxu0 %v1522
    %1888 = vmatprep.subr.bf16.mxu0 0
    %1889 = vmatpush1.bf16.msra.mxu0 %v1523
    %1890 = vmatprep.subr.bf16.mxu0 0
    %1891 = vmatpush1.bf16.msra.mxu0 %v1524
    %1892 = vmatprep.subr.bf16.mxu0 0
    %1893 = vmatpush1.bf16.msra.mxu0 %v1525
    %1894 = vmatprep.subr.bf16.mxu0 0
    %1895 = vmatpush1.bf16.msra.mxu0 %v1526
    %1896 = vmatprep.subr.bf16.mxu0 0
    %1897 = vmatpush1.bf16.msra.mxu0 %v1527
    %1898 = vmatprep.mubr.bf16.mxu0 %v653
    %1899 = vmatmul.mubr.bf16.gmra.mrb[0].mxu0 %v652
    %v1900 = vpop.f32.mrb[0].mxu0
    %v1901 = vadd.f32 %v1836, %v1900
    %v1902 = vpop.f32.mrb[0].mxu0
    %v1903 = vpop.f32.mrb[0].mxu0
    %v1904 = vadd.f32 %v1839, %v1903
    %v1905 = vpop.f32.mrb[0].mxu0
    %1906 = vmatprep.mubr.bf16.mxu0 %v669
    %1907 = vmatmul.mubr.bf16.gmra.mrb[0].mxu0 %v668
    %v1908 = vpop.f32.mrb[0].mxu0
    %v1909 = vadd.f32 %v1844, %v1908
    %v1910 = vpop.f32.mrb[0].mxu0
    %v1911 = vpop.f32.mrb[0].mxu0
    %v1912 = vadd.f32 %v1847, %v1911
    %v1913 = vpop.f32.mrb[0].mxu0
    %1914 = vmatprep.mubr.bf16.mxu0 %v685
    %1915 = vmatmul.mubr.bf16.gmra.mrb[0].mxu0 %v684
    %v1916 = vpop.f32.mrb[0].mxu0
    %v1917 = vadd.f32 %v1852, %v1916
    %v1918 = vpop.f32.mrb[0].mxu0
    %v1919 = vpop.f32.mrb[0].mxu0
    %v1920 = vadd.f32 %v1855, %v1919
    %v1921 = vpop.f32.mrb[0].mxu0
    %1922 = vmatprep.mubr.bf16.mxu0 %v701
    %1923 = vmatmul.mubr.bf16.gmra.mrb[0].mxu0 %v700
    %v1924 = vpop.f32.mrb[0].mxu0
    %v1925 = vadd.f32 %v1860, %v1924
    %v1926 = vpop.f32.mrb[0].mxu0
    %v1927 = vpop.f32.mrb[0].mxu0
    %v1928 = vadd.f32 %v1863, %v1927
    %v1929 = vpop.f32.mrb[0].mxu0
    %1930 = vdwg.mxu0
    %1931 = vmatprep.subr.bf16.mxu0 0
    %1932 = vmatpush1.bf16.msra.mxu0 %v1528
    %1933 = vmatprep.subr.bf16.mxu0 0
    %1934 = vmatpush1.bf16.msra.mxu0 %v1529
    %1935 = vmatprep.subr.bf16.mxu0 0
    %1936 = vmatpush1.bf16.msra.mxu0 %v1530
    %1937 = vmatprep.subr.bf16.mxu0 0
    %1938 = vmatpush1.bf16.msra.mxu0 %v1531
    %1939 = vmatprep.subr.bf16.mxu0 0
    %1940 = vmatpush1.bf16.msra.mxu0 %v1532
    %1941 = vmatprep.subr.bf16.mxu0 0
    %1942 = vmatpush1.bf16.msra.mxu0 %v1533
    %1943 = vmatprep.subr.bf16.mxu0 0
    %1944 = vmatpush1.bf16.msra.mxu0 %v1534
    %1945 = vmatprep.subr.bf16.mxu0 0
    %1946 = vmatpush1.bf16.msra.mxu0 %v1535
    %1947 = vmatprep.subr.bf16.mxu0 0
    %1948 = vmatpush1.bf16.msra.mxu0 %v1536
    %1949 = vmatprep.subr.bf16.mxu0 0
    %1950 = vmatpush1.bf16.msra.mxu0 %v1537
    %1951 = vmatprep.subr.bf16.mxu0 0
    %1952 = vmatpush1.bf16.msra.mxu0 %v1538
    %1953 = vmatprep.subr.bf16.mxu0 0
    %1954 = vmatpush1.bf16.msra.mxu0 %v1539
    %1955 = vmatprep.subr.bf16.mxu0 0
    %1956 = vmatpush1.bf16.msra.mxu0 %v1540
    %1957 = vmatprep.subr.bf16.mxu0 0
    %1958 = vmatpush1.bf16.msra.mxu0 %v1541
    %1959 = vmatprep.subr.bf16.mxu0 0
    %1960 = vmatpush1.bf16.msra.mxu0 %v1542
    %1961 = vmatprep.subr.bf16.mxu0 0
    %1962 = vmatpush1.bf16.msra.mxu0 %v1543
    %1963 = vmatprep.mubr.bf16.mxu0 %v655
    %1964 = vmatmul.mubr.bf16.gmra.mrb[0].mxu0 %v654
    %v1965 = vpop.f32.mrb[0].mxu0
    %v1966 = vadd.f32 %v1901, %v1965
    %v1967 = vpop.f32.mrb[0].mxu0
    %v1968 = vpop.f32.mrb[0].mxu0
    %v1969 = vadd.f32 %v1904, %v1968
    %v1970 = vpop.f32.mrb[0].mxu0
    %1971 = vmatprep.mubr.bf16.mxu0 %v671
    %1972 = vmatmul.mubr.bf16.gmra.mrb[0].mxu0 %v670
    %v1973 = vpop.f32.mrb[0].mxu0
    %v1974 = vadd.f32 %v1909, %v1973
    %v1975 = vpop.f32.mrb[0].mxu0
    %v1976 = vpop.f32.mrb[0].mxu0
    %v1977 = vadd.f32 %v1912, %v1976
    %v1978 = vpop.f32.mrb[0].mxu0
    %1979 = vmatprep.mubr.bf16.mxu0 %v687
    %1980 = vmatmul.mubr.bf16.gmra.mrb[0].mxu0 %v686
    %v1981 = vpop.f32.mrb[0].mxu0
    %v1982 = vadd.f32 %v1917, %v1981
    %v1983 = vpop.f32.mrb[0].mxu0
    %v1984 = vpop.f32.mrb[0].mxu0
    %v1985 = vadd.f32 %v1920, %v1984
    %v1986 = vpop.f32.mrb[0].mxu0
    %1987 = vmatprep.mubr.bf16.mxu0 %v703
    %1988 = vmatmul.mubr.bf16.gmra.mrb[0].mxu0 %v702
    %v1989 = vpop.f32.mrb[0].mxu0
    %v1990 = vadd.f32 %v1925, %v1989
    %v1991 = vpop.f32.mrb[0].mxu0
    %v1992 = vpop.f32.mrb[0].mxu0
    %v1993 = vadd.f32 %v1928, %v1992
    %v1994 = vpop.f32.mrb[0].mxu0
    %1995 = vdwg.mxu0
    %1996 = vmatprep.subr.bf16.mxu0 0
    %1997 = vmatpush1.bf16.msra.mxu0 %v1544
    %1998 = vmatprep.subr.bf16.mxu0 0
    %1999 = vmatpush1.bf16.msra.mxu0 %v1545
    %2000 = vmatprep.subr.bf16.mxu0 0
    %2001 = vmatpush1.bf16.msra.mxu0 %v1546
    %2002 = vmatprep.subr.bf16.mxu0 0
    %2003 = vmatpush1.bf16.msra.mxu0 %v1547
    %2004 = vmatprep.subr.bf16.mxu0 0
    %2005 = vmatpush1.bf16.msra.mxu0 %v1548
    %2006 = vmatprep.subr.bf16.mxu0 0
    %2007 = vmatpush1.bf16.msra.mxu0 %v1549
    %2008 = vmatprep.subr.bf16.mxu0 0
    %2009 = vmatpush1.bf16.msra.mxu0 %v1550
    %2010 = vmatprep.subr.bf16.mxu0 0
    %2011 = vmatpush1.bf16.msra.mxu0 %v1551
    %2012 = vmatprep.subr.bf16.mxu0 0
    %2013 = vmatpush1.bf16.msra.mxu0 %v1552
    %2014 = vmatprep.subr.bf16.mxu0 0
    %2015 = vmatpush1.bf16.msra.mxu0 %v1553
    %2016 = vmatprep.subr.bf16.mxu0 0
    %2017 = vmatpush1.bf16.msra.mxu0 %v1554
    %2018 = vmatprep.subr.bf16.mxu0 0
    %2019 = vmatpush1.bf16.msra.mxu0 %v1555
    %2020 = vmatprep.subr.bf16.mxu0 0
    %2021 = vmatpush1.bf16.msra.mxu0 %v1556
    %2022 = vmatprep.subr.bf16.mxu0 0
    %2023 = vmatpush1.bf16.msra.mxu0 %v1557
    %2024 = vmatprep.subr.bf16.mxu0 0
    %2025 = vmatpush1.bf16.msra.mxu0 %v1558
    %2026 = vmatprep.subr.bf16.mxu0 0
    %2027 = vmatpush1.bf16.msra.mxu0 %v1559
    %2028 = vmatprep.mubr.bf16.mxu0 %v657
    %2029 = vmatmul.mubr.bf16.gmra.mrb[0].mxu0 %v656
    %v2030 = vpop.f32.mrb[0].mxu0
    %v2031 = vadd.f32 %v1966, %v2030
    %v2032 = vpop.f32.mrb[0].mxu0
    %v2033 = vpop.f32.mrb[0].mxu0
    %v2034 = vadd.f32 %v1969, %v2033
    %v2035 = vpop.f32.mrb[0].mxu0
    %2036 = vmatprep.mubr.bf16.mxu0 %v673
    %2037 = vmatmul.mubr.bf16.gmra.mrb[0].mxu0 %v672
    %v2038 = vpop.f32.mrb[0].mxu0
    %v2039 = vadd.f32 %v1974, %v2038
    %v2040 = vpop.f32.mrb[0].mxu0
    %v2041 = vpop.f32.mrb[0].mxu0
    %v2042 = vadd.f32 %v1977, %v2041
    %v2043 = vpop.f32.mrb[0].mxu0
    %2044 = vmatprep.mubr.bf16.mxu0 %v689
    %2045 = vmatmul.mubr.bf16.gmra.mrb[0].mxu0 %v688
    %v2046 = vpop.f32.mrb[0].mxu0
    %v2047 = vadd.f32 %v1982, %v2046
    %v2048 = vpop.f32.mrb[0].mxu0
    %v2049 = vpop.f32.mrb[0].mxu0
    %v2050 = vadd.f32 %v1985, %v2049
    %v2051 = vpop.f32.mrb[0].mxu0
    %2052 = vmatprep.mubr.bf16.mxu0 %v705
    %2053 = vmatmul.mubr.bf16.gmra.mrb[0].mxu0 %v704
    %v2054 = vpop.f32.mrb[0].mxu0
    %v2055 = vadd.f32 %v1990, %v2054
    %v2056 = vpop.f32.mrb[0].mxu0
    %v2057 = vpop.f32.mrb[0].mxu0
    %v2058 = vadd.f32 %v1993, %v2057
    %v2059 = vpop.f32.mrb[0].mxu0
    %2060 = vdwg.mxu0
    %2061 = vmatprep.subr.bf16.mxu0 0
    %2062 = vmatpush1.bf16.msra.mxu0 %v1560
    %2063 = vmatprep.subr.bf16.mxu0 0
    %2064 = vmatpush1.bf16.msra.mxu0 %v1561
    %2065 = vmatprep.subr.bf16.mxu0 0
    %2066 = vmatpush1.bf16.msra.mxu0 %v1562
    %2067 = vmatprep.subr.bf16.mxu0 0
    %2068 = vmatpush1.bf16.msra.mxu0 %v1563
    %2069 = vmatprep.subr.bf16.mxu0 0
    %2070 = vmatpush1.bf16.msra.mxu0 %v1564
    %2071 = vmatprep.subr.bf16.mxu0 0
    %2072 = vmatpush1.bf16.msra.mxu0 %v1565
    %2073 = vmatprep.subr.bf16.mxu0 0
    %2074 = vmatpush1.bf16.msra.mxu0 %v1566
    %2075 = vmatprep.subr.bf16.mxu0 0
    %2076 = vmatpush1.bf16.msra.mxu0 %v1567
    %2077 = vmatprep.subr.bf16.mxu0 0
    %2078 = vmatpush1.bf16.msra.mxu0 %v1568
    %2079 = vmatprep.subr.bf16.mxu0 0
    %2080 = vmatpush1.bf16.msra.mxu0 %v1569
    %2081 = vmatprep.subr.bf16.mxu0 0
    %2082 = vmatpush1.bf16.msra.mxu0 %v1570
    %2083 = vmatprep.subr.bf16.mxu0 0
    %2084 = vmatpush1.bf16.msra.mxu0 %v1571
    %2085 = vmatprep.subr.bf16.mxu0 0
    %2086 = vmatpush1.bf16.msra.mxu0 %v1572
    %2087 = vmatprep.subr.bf16.mxu0 0
    %2088 = vmatpush1.bf16.msra.mxu0 %v1573
    %2089 = vmatprep.subr.bf16.mxu0 0
    %2090 = vmatpush1.bf16.msra.mxu0 %v1574
    %2091 = vmatprep.subr.bf16.mxu0 0
    %2092 = vmatpush1.bf16.msra.mxu0 %v1575
    %2093 = vmatprep.mubr.bf16.mxu0 %v659
    %2094 = vmatmul.mubr.bf16.gmra.mrb[0].mxu0 %v658
    %v2095 = vpop.f32.mrb[0].mxu0
    %v2096 = vadd.f32 %v2031, %v2095
    %v2097 = vpop.f32.mrb[0].mxu0
    %v2098 = vpop.f32.mrb[0].mxu0
    %v2099 = vadd.f32 %v2034, %v2098
    %v2100 = vpop.f32.mrb[0].mxu0
    %2101 = vmatprep.mubr.bf16.mxu0 %v675
    %2102 = vmatmul.mubr.bf16.gmra.mrb[0].mxu0 %v674
    %v2103 = vpop.f32.mrb[0].mxu0
    %v2104 = vadd.f32 %v2039, %v2103
    %v2105 = vpop.f32.mrb[0].mxu0
    %v2106 = vpop.f32.mrb[0].mxu0
    %v2107 = vadd.f32 %v2042, %v2106
    %v2108 = vpop.f32.mrb[0].mxu0
    %2109 = vmatprep.mubr.bf16.mxu0 %v691
    %2110 = vmatmul.mubr.bf16.gmra.mrb[0].mxu0 %v690
    %v2111 = vpop.f32.mrb[0].mxu0
    %v2112 = vadd.f32 %v2047, %v2111
    %v2113 = vpop.f32.mrb[0].mxu0
    %v2114 = vpop.f32.mrb[0].mxu0
    %v2115 = vadd.f32 %v2050, %v2114
    %v2116 = vpop.f32.mrb[0].mxu0
    %2117 = vmatprep.mubr.bf16.mxu0 %v707
    %2118 = vmatmul.mubr.bf16.gmra.mrb[0].mxu0 %v706
    %v2119 = vpop.f32.mrb[0].mxu0
    %v2120 = vadd.f32 %v2055, %v2119
    %v2121 = vpop.f32.mrb[0].mxu0
    %v2122 = vpop.f32.mrb[0].mxu0
    %v2123 = vadd.f32 %v2058, %v2122
    %v2124 = vpop.f32.mrb[0].mxu0
    %2125 = vdwg.mxu0
    %2126 = vmatprep.subr.bf16.mxu0 0
    %2127 = vmatpush1.bf16.msra.mxu0 %v1576
    %2128 = vmatprep.subr.bf16.mxu0 0
    %2129 = vmatpush1.bf16.msra.mxu0 %v1577
    %2130 = vmatprep.subr.bf16.mxu0 0
    %2131 = vmatpush1.bf16.msra.mxu0 %v1578
    %2132 = vmatprep.subr.bf16.mxu0 0
    %2133 = vmatpush1.bf16.msra.mxu0 %v1579
    %2134 = vmatprep.subr.bf16.mxu0 0
    %2135 = vmatpush1.bf16.msra.mxu0 %v1580
    %2136 = vmatprep.subr.bf16.mxu0 0
    %2137 = vmatpush1.bf16.msra.mxu0 %v1581
    %2138 = vmatprep.subr.bf16.mxu0 0
    %2139 = vmatpush1.bf16.msra.mxu0 %v1582
    %2140 = vmatprep.subr.bf16.mxu0 0
    %2141 = vmatpush1.bf16.msra.mxu0 %v1583
    %2142 = vmatprep.subr.bf16.mxu0 0
    %2143 = vmatpush1.bf16.msra.mxu0 %v1584
    %2144 = vmatprep.subr.bf16.mxu0 0
    %2145 = vmatpush1.bf16.msra.mxu0 %v1585
    %2146 = vmatprep.subr.bf16.mxu0 0
    %2147 = vmatpush1.bf16.msra.mxu0 %v1586
    %2148 = vmatprep.subr.bf16.mxu0 0
    %2149 = vmatpush1.bf16.msra.mxu0 %v1587
    %2150 = vmatprep.subr.bf16.mxu0 0
    %2151 = vmatpush1.bf16.msra.mxu0 %v1588
    %2152 = vmatprep.subr.bf16.mxu0 0
    %2153 = vmatpush1.bf16.msra.mxu0 %v1589
    %2154 = vmatprep.subr.bf16.mxu0 0
    %2155 = vmatpush1.bf16.msra.mxu0 %v1590
    %2156 = vmatprep.subr.bf16.mxu0 0
    %2157 = vmatpush1.bf16.msra.mxu0 %v1591
    %2158 = vmatprep.mubr.bf16.mxu0 %v661
    %2159 = vmatmul.mubr.bf16.gmra.mrb[0].mxu0 %v660
    %v2160 = vpop.f32.mrb[0].mxu0
    %v2161 = vadd.f32 %v2096, %v2160
    %v2162 = vpop.f32.mrb[0].mxu0
    %v2163 = vpop.f32.mrb[0].mxu0
    %v2164 = vadd.f32 %v2099, %v2163
    %v2165 = vpop.f32.mrb[0].mxu0
    %2166 = vmatprep.mubr.bf16.mxu0 %v677
    %2167 = vmatmul.mubr.bf16.gmra.mrb[0].mxu0 %v676
    %v2168 = vpop.f32.mrb[0].mxu0
    %v2169 = vadd.f32 %v2104, %v2168
    %v2170 = vpop.f32.mrb[0].mxu0
    %v2171 = vpop.f32.mrb[0].mxu0
    %v2172 = vadd.f32 %v2107, %v2171
    %v2173 = vpop.f32.mrb[0].mxu0
    %2174 = vmatprep.mubr.bf16.mxu0 %v693
    %2175 = vmatmul.mubr.bf16.gmra.mrb[0].mxu0 %v692
    %v2176 = vpop.f32.mrb[0].mxu0
    %v2177 = vadd.f32 %v2112, %v2176
    %v2178 = vpop.f32.mrb[0].mxu0
    %v2179 = vpop.f32.mrb[0].mxu0
    %v2180 = vadd.f32 %v2115, %v2179
    %v2181 = vpop.f32.mrb[0].mxu0
    %2182 = vmatprep.mubr.bf16.mxu0 %v709
    %2183 = vmatmul.mubr.bf16.gmra.mrb[0].mxu0 %v708
    %v2184 = vpop.f32.mrb[0].mxu0
    %v2185 = vadd.f32 %v2120, %v2184
    %v2186 = vpop.f32.mrb[0].mxu0
    %v2187 = vpop.f32.mrb[0].mxu0
    %v2188 = vadd.f32 %v2123, %v2187
    %v2189 = vpop.f32.mrb[0].mxu0
    %2190 = vdwg.mxu0
    %2191 = vmatprep.subr.bf16.mxu0 0
    %2192 = vmatpush1.bf16.msra.mxu0 %v1592
    %2193 = vmatprep.subr.bf16.mxu0 0
    %2194 = vmatpush1.bf16.msra.mxu0 %v1593
    %2195 = vmatprep.subr.bf16.mxu0 0
    %2196 = vmatpush1.bf16.msra.mxu0 %v1594
    %2197 = vmatprep.subr.bf16.mxu0 0
    %2198 = vmatpush1.bf16.msra.mxu0 %v1595
    %2199 = vmatprep.subr.bf16.mxu0 0
    %2200 = vmatpush1.bf16.msra.mxu0 %v1596
    %2201 = vmatprep.subr.bf16.mxu0 0
    %2202 = vmatpush1.bf16.msra.mxu0 %v1597
    %2203 = vmatprep.subr.bf16.mxu0 0
    %2204 = vmatpush1.bf16.msra.mxu0 %v1598
    %2205 = vmatprep.subr.bf16.mxu0 0
    %2206 = vmatpush1.bf16.msra.mxu0 %v1599
    %2207 = vmatprep.subr.bf16.mxu0 0
    %2208 = vmatpush1.bf16.msra.mxu0 %v1600
    %2209 = vmatprep.subr.bf16.mxu0 0
    %2210 = vmatpush1.bf16.msra.mxu0 %v1601
    %2211 = vmatprep.subr.bf16.mxu0 0
    %2212 = vmatpush1.bf16.msra.mxu0 %v1602
    %2213 = vmatprep.subr.bf16.mxu0 0
    %2214 = vmatpush1.bf16.msra.mxu0 %v1603
    %2215 = vmatprep.subr.bf16.mxu0 0
    %2216 = vmatpush1.bf16.msra.mxu0 %v1604
    %2217 = vmatprep.subr.bf16.mxu0 0
    %2218 = vmatpush1.bf16.msra.mxu0 %v1605
    %2219 = vmatprep.subr.bf16.mxu0 0
    %2220 = vmatpush1.bf16.msra.mxu0 %v1606
    %2221 = vmatprep.subr.bf16.mxu0 0
    %2222 = vmatpush1.bf16.msra.mxu0 %v1607
    %2223 = vmatprep.mubr.bf16.mxu0 %v663
    %2224 = vmatmul.mubr.bf16.gmra.mrb[0].mxu0 %v662
    %v2225 = vpop.f32.mrb[0].mxu0
    %v2226 = vadd.f32 %v2161, %v2225
    %v2227 = vpop.f32.mrb[0].mxu0
    %v2228 = vpop.f32.mrb[0].mxu0
    %v2229 = vadd.f32 %v2164, %v2228
    %v2230 = vpop.f32.mrb[0].mxu0
    %2231 = vmatprep.mubr.bf16.mxu0 %v679
    %2232 = vmatmul.mubr.bf16.gmra.mrb[0].mxu0 %v678
    %v2233 = vpop.f32.mrb[0].mxu0
    %v2234 = vadd.f32 %v2169, %v2233
    %v2235 = vpop.f32.mrb[0].mxu0
    %v2236 = vpop.f32.mrb[0].mxu0
    %v2237 = vadd.f32 %v2172, %v2236
    %v2238 = vpop.f32.mrb[0].mxu0
    %2239 = vmatprep.mubr.bf16.mxu0 %v695
    %2240 = vmatmul.mubr.bf16.gmra.mrb[0].mxu0 %v694
    %v2241 = vpop.f32.mrb[0].mxu0
    %v2242 = vadd.f32 %v2177, %v2241
    %v2243 = vpop.f32.mrb[0].mxu0
    %v2244 = vpop.f32.mrb[0].mxu0
    %v2245 = vadd.f32 %v2180, %v2244
    %v2246 = vpop.f32.mrb[0].mxu0
    %2247 = vmatprep.mubr.bf16.mxu0 %v711
    %2248 = vmatmul.mubr.bf16.gmra.mrb[0].mxu0 %v710
    %v2249 = vpop.f32.mrb[0].mxu0
    %v2250 = vadd.f32 %v2185, %v2249
    %v2251 = vpop.f32.mrb[0].mxu0
    %v2252 = vpop.f32.mrb[0].mxu0
    %v2253 = vadd.f32 %v2188, %v2252
    %v2254 = vpop.f32.mrb[0].mxu0
    %2255 = vdwg.mxu0
    %2256 = vst [vmem:[#allocation6] sm:$0xff] %v2226
    %2257 = vst [vmem:[#allocation6 + $0x8] sm:$0xff] %v2229
    %2258 = vst [vmem:[#allocation6 + $0x10] sm:$0xff] %v2234
    %2259 = vst [vmem:[#allocation6 + $0x18] sm:$0xff] %v2237
    %2260 = vst [vmem:[#allocation6 + $0x20] sm:$0xff] %v2242
    %2261 = vst [vmem:[#allocation6 + $0x28] sm:$0xff] %v2245
    %2262 = vst [vmem:[#allocation6 + $0x30] sm:$0xff] %v2250
    %2263 = vst [vmem:[#allocation6 + $0x38] sm:$0xff] %v2253
    // Predicated region
    $region14: #{tpu_custom_call.1} parent=1 // pred_check
      _
    $region15: #{tpu_custom_call.1} parent=1 // pred_check_branch
      %2265 = sbr.rel (0) target = $region17
    $region16: #{tpu_custom_call.1} parent=1 // pred_region
      %s2267 = ssub.s32 1024, 1024
      %2268 = vsyncadd [#allocation5], %s2267
      %s2269 = sshll.u32 [#allocation6], 4
      %s2270 = int_to_ptr.vmem [resolvable:$true] %s2269
      %2275 = dma.vmem_to_hbm [thread:$0]  %s2270, 1024, %s2, [#allocation5], 128, 128, 8
    $region17: #{tpu_custom_call.1} parent=1 // pred_fallthru
      _
    // Predicated region
    $region18: #{tpu_custom_call.1} parent=1 // pred_check
      _
    $region19: #{tpu_custom_call.1} parent=1 // pred_check_branch
      %2277 = sbr.rel (0) target = $region21
    $region20: #{tpu_custom_call.1} parent=1 // pred_region
      %2278 = dma.done [#allocation5], 1024
    $region21: #{tpu_custom_call.1} parent=1 // pred_fallthru
      _
    %2279 = vsyncpa [#allocation4], 1
    %2280 = vsyncpa [#allocation5], 1

</llo_original>
